<compile_context>
chip_gen: v5e
topology: v5e:2x2
jax: 0.10.0
libtpu: 0.0.40
codegen_flags: <defaults>
</compile_context>

<pallas_src>
import functools

import jax
import jax.numpy as jnp
from jax import lax
from jax.experimental import pallas as pl
from jax.experimental.pallas import tpu as pltpu

LANES = 128  # lane-dense output width


def _lstm_ae_kernel(x2d_ref, wih1_ref, whh1_ref, b1_ref,
                    wih2_ref, whh2_ref, b2_ref,
                    wl_ref, bl_ref, out_ref,
                    *, n_hidden, seq, batch):
    """Whole AutoEncoder forward in one kernel invocation (everything fits in VMEM).

    x2d_ref  : (seq*B, n_features)   f32  time-major, batch padded to B
    wih*     : (in_dim, 4*H)         f32  PyTorch weight_ih_l0^T, g-gate cols pre-scaled by 2
    whh*     : (H, 4*H)              f32  PyTorch weight_hh_l0^T, g-gate cols pre-scaled by 2
    b*       : (1, 4*H)              f32  bias_ih + bias_hh, g-gate cols pre-scaled by 2
    wl       : (H, LANES)            f32  PyTorch linear.weight^T, zero-padded to 128 lanes
    bl       : (1, LANES)            f32  zero-padded to 128 lanes
    out_ref  : (seq*B, LANES)        f32  lane-dense output slab
    """
    H = n_hidden
    B = batch

    wih1 = wih1_ref[...]
    whh1 = whh1_ref[...]
    b1 = b1_ref[...]
    wih2 = wih2_ref[...]
    whh2 = whh2_ref[...]
    b2 = b2_ref[...]
    wl = wl_ref[...]
    bl = bl_ref[...]

    # ---- encoder input projection for ALL timesteps in one matmul ----
    x_all = x2d_ref[...]                                                  # (seq*B, feat)
    xg_all = jnp.dot(x_all, wih1, preferred_element_type=jnp.float32) + b1  # (seq*B, 4H)

    def gates_to_hc(gates, c):
        # Single EUP slab op per step: t = tanh(0.5 * gates).
        # With the g-gate columns pre-scaled by 2 this gives
        #   i,f,o = sigmoid(raw) = 0.5*(t+1)     (tanh half-angle identity)
        #   g     = tanh(raw)    = t[:, 2H:3H]
        # PyTorch LSTM gate order: i, f, g, o.
        t = jnp.tanh(0.5 * gates)
        i = 0.5 * (t[:, 0 * H:1 * H] + 1.0)
        f = 0.5 * (t[:, 1 * H:2 * H] + 1.0)
        g = t[:, 2 * H:3 * H]
        o = 0.5 * (t[:, 3 * H:4 * H] + 1.0)
        c_new = f * c + i * g
        h_new = o * jnp.tanh(c_new)
        return h_new, c_new

    h = jnp.zeros((B, H), jnp.float32)
    c = jnp.zeros((B, H), jnp.float32)

    # ---- encoder LSTM (lstm1): per-step serial work is only h @ whh1 ----
    # Static Python loop: seq is compile-time -> fully unrolled, static slices.
    for t in range(seq):
        gates = (xg_all[t * B:(t + 1) * B, :]
                 + jnp.dot(h, whh1, preferred_element_type=jnp.float32))
        h, c = gates_to_hc(gates, c)
    h_enc = h                                                             # (B, H)

    # ---- decoder LSTM (lstm2): input is h_enc at every timestep ----
    # Loop-invariant input projection hoisted out of the recurrence.
    dec_xg = jnp.dot(h_enc, wih2, preferred_element_type=jnp.float32) + b2  # (B, 4H)

    h = jnp.zeros((B, H), jnp.float32)
    c = jnp.zeros((B, H), jnp.float32)
    hs = []
    for t in range(seq):
        gates = dec_xg + jnp.dot(h, whh2, preferred_element_type=jnp.float32)
        h, c = gates_to_hc(gates, c)
        hs.append(h)                       # carry as values; no VMEM round-trip

    # ---- deferred output linear: one big matmul + one lane-dense bulk store ----
    h_all = jnp.concatenate(hs, axis=0)                                   # (seq*B, H)
    y = jnp.dot(h_all, wl, preferred_element_type=jnp.float32) + bl       # (seq*B, 128)
    out_ref[...] = y.astype(out_ref.dtype)


def _prescale_g_gate(w, H):
    """Scale the g-gate (3rd) column block [2H:3H) by 2 (tanh half-angle trick)."""
    scale = jnp.concatenate([jnp.ones((H,), jnp.float32),
                             jnp.ones((H,), jnp.float32),
                             jnp.full((H,), 2.0, jnp.float32),
                             jnp.ones((H,), jnp.float32)])
    return w * scale[None, :]


def lstm_autoencoder(x, params):
    """x: (batch, seq, n_features) float32  ->  (batch, seq, n_features) float32."""
    batch, seq, feat = x.shape
    H = params["whh1"].shape[0]

    # Pad batch to a multiple of 8 sublanes so each per-step (B, 4H) gate slab
    # is a full tile; padded rows are independent garbage, sliced off below.
    B = -(-batch // 8) * 8
    x_tm = jnp.transpose(x, (1, 0, 2))                       # (seq, batch, feat)
    if B != batch:
        x_tm = jnp.pad(x_tm, ((0, 0), (0, B - batch), (0, 0)))
    x2d = x_tm.reshape(seq * B, feat)                        # (seq*B, feat)

    # Weight prep (kept outside the kernel; params dict stays in PyTorch semantics):
    #  * pre-scale g-gate columns by 2 so the kernel needs a single tanh per step.
    wih1 = _prescale_g_gate(params["wih1"], H)
    whh1 = _prescale_g_gate(params["whh1"], H)
    b1 = _prescale_g_gate(params["b1"], H)
    wih2 = _prescale_g_gate(params["wih2"], H)
    whh2 = _prescale_g_gate(params["whh2"], H)
    b2 = _prescale_g_gate(params["b2"], H)
    #  * zero-pad the output linear to 128 lanes for a lane-dense store.
    wl = jnp.pad(params["wl"], ((0, 0), (0, LANES - feat)))  # (H, 128)
    bl = jnp.pad(params["bl"], ((0, 0), (0, LANES - feat)))  # (1, 128)

    kernel = functools.partial(_lstm_ae_kernel, n_hidden=H, seq=seq, batch=B)
    vmem = pl.BlockSpec(memory_space=pltpu.MemorySpace.VMEM)

    out2d = pl.pallas_call(
        kernel,
        out_shape=jax.ShapeDtypeStruct((seq * B, LANES), jnp.float32),
        in_specs=[vmem] * 9,
        out_specs=vmem,
        compiler_params=pltpu.CompilerParams(vmem_limit_bytes=32 * 1024 * 1024),
    )(x2d, wih1, whh1, b1, wih2, whh2, b2, wl, bl)

    out_tm = out2d.reshape(seq, B, LANES)                    # (seq, B, 128)
    out = jnp.transpose(out_tm, (1, 0, 2))                   # (B, seq, 128)
    return out[:batch, :, :feat]                             # drop pad rows / pad lanes


def init_params(key, n_features, n_hidden):
    """Deterministic init mirroring PyTorch defaults: U(-1/sqrt(H), 1/sqrt(H))."""
    k = 1.0 / float(jnp.sqrt(jnp.float32(n_hidden)))
    keys = jax.random.split(key, 10)

    def u(kk, shape, bound):
        return jax.random.uniform(kk, shape, jnp.float32, -bound, bound)

    params = {
        # lstm1: input n_features -> hidden H  (weights stored transposed: (in, 4H))
        "wih1": u(keys[0], (n_features, 4 * n_hidden), k),
        "whh1": u(keys[1], (n_hidden, 4 * n_hidden), k),
        "b1":   u(keys[2], (1, 4 * n_hidden), k) + u(keys[3], (1, 4 * n_hidden), k),
        # lstm2: input H -> hidden H
        "wih2": u(keys[4], (n_hidden, 4 * n_hidden), k),
        "whh2": u(keys[5], (n_hidden, 4 * n_hidden), k),
        "b2":   u(keys[6], (1, 4 * n_hidden), k) + u(keys[7], (1, 4 * n_hidden), k),
        # linear: H -> n_features (stored transposed: (H, n_features))
        "wl":   u(keys[8], (n_hidden, n_features), k),
        "bl":   u(keys[9], (1, n_features), k),
    }
    return params


def reference_forward(x, params):
    """Pure-JAX reference with identical semantics (for correctness check)."""
    H = params["whh1"].shape[0]
    batch = x.shape[0]

    def cell(x_t, h, c, wih, whh, b):
        gates = x_t @ wih + h @ whh + b
        i = jax.nn.sigmoid(gates[:, 0 * H:1 * H])
        f = jax.nn.sigmoid(gates[:, 1 * H:2 * H])
        g = jnp.tanh(gates[:, 2 * H:3 * H])
        o = jax.nn.sigmoid(gates[:, 3 * H:4 * H])
        c_new = f * c + i * g
        return o * jnp.tanh(c_new), c_new

    h0 = jnp.zeros((batch, H), jnp.float32)
    c0 = jnp.zeros((batch, H), jnp.float32)

    def enc_step(carry, x_t):
        h, c = carry
        h, c = cell(x_t, h, c, params["wih1"], params["whh1"], params["b1"])
        return (h, c), None

    (h_enc, _), _ = lax.scan(enc_step, (h0, c0), jnp.transpose(x, (1, 0, 2)))

    def dec_step(carry, _):
        h, c = carry
        h, c = cell(h_enc, h, c, params["wih2"], params["whh2"], params["b2"])
        return (h, c), h

    _, hs = lax.scan(dec_step, (h0, c0), None, length=x.shape[1])  # (seq, batch, H)
    y = hs @ params["wl"] + params["bl"]                           # (seq, batch, feat)
    return jnp.transpose(y, (1, 0, 2))


if __name__ == "__main__":
    batch, seq, n_features, n_hidden = 2, 8, 4, 32

    key = jax.random.PRNGKey(0)
    k_x, k_p = jax.random.split(key)
    x = jax.random.normal(k_x, (batch, seq, n_features), jnp.float32)
    params = init_params(k_p, n_features, n_hidden)

    out = lstm_autoencoder(x, params)
    out = jax.block_until_ready(out)

    ref = jax.block_until_ready(reference_forward(x, params))

    assert out.shape == (batch, seq, n_features), out.shape
    assert jnp.allclose(out, ref, atol=1e-4, rtol=1e-4), (
        f"max abs diff {jnp.max(jnp.abs(out - ref))}")

    print("KERNEL_OK")
</pallas_src>

<mosaic_0001>
module attributes {stable_mosaic.version = 11 : i64} {
  func.func @_lstm_ae_kernel(%arg0: memref<64x4xf32, #tpu.memory_space<vmem>>, %arg1: memref<4x128xf32, #tpu.memory_space<vmem>>, %arg2: memref<32x128xf32, #tpu.memory_space<vmem>>, %arg3: memref<1x128xf32, #tpu.memory_space<vmem>>, %arg4: memref<32x128xf32, #tpu.memory_space<vmem>>, %arg5: memref<32x128xf32, #tpu.memory_space<vmem>>, %arg6: memref<1x128xf32, #tpu.memory_space<vmem>>, %arg7: memref<32x128xf32, #tpu.memory_space<vmem>>, %arg8: memref<1x128xf32, #tpu.memory_space<vmem>>, %arg9: memref<64x128xf32, #tpu.memory_space<vmem>>) attributes {dimension_semantics = [], scalar_prefetch = 0 : i64, scratch_operands = 0 : i64, tpu.core_type = #tpu.core_type<tc>} {
    %c0 = arith.constant 0 : index
    %c0_0 = arith.constant 0 : index
    %0 = vector.load %arg1[%c0, %c0_0] : memref<4x128xf32, #tpu.memory_space<vmem>>, vector<4x128xf32>
    %c0_1 = arith.constant 0 : index
    %c0_2 = arith.constant 0 : index
    %1 = vector.load %arg2[%c0_1, %c0_2] : memref<32x128xf32, #tpu.memory_space<vmem>>, vector<32x128xf32>
    %c0_3 = arith.constant 0 : index
    %c0_4 = arith.constant 0 : index
    %2 = vector.load %arg3[%c0_3, %c0_4] : memref<1x128xf32, #tpu.memory_space<vmem>>, vector<1x128xf32>
    %c0_5 = arith.constant 0 : index
    %c0_6 = arith.constant 0 : index
    %3 = vector.load %arg4[%c0_5, %c0_6] : memref<32x128xf32, #tpu.memory_space<vmem>>, vector<32x128xf32>
    %c0_7 = arith.constant 0 : index
    %c0_8 = arith.constant 0 : index
    %4 = vector.load %arg5[%c0_7, %c0_8] : memref<32x128xf32, #tpu.memory_space<vmem>>, vector<32x128xf32>
    %c0_9 = arith.constant 0 : index
    %c0_10 = arith.constant 0 : index
    %5 = vector.load %arg6[%c0_9, %c0_10] : memref<1x128xf32, #tpu.memory_space<vmem>>, vector<1x128xf32>
    %c0_11 = arith.constant 0 : index
    %c0_12 = arith.constant 0 : index
    %6 = vector.load %arg7[%c0_11, %c0_12] : memref<32x128xf32, #tpu.memory_space<vmem>>, vector<32x128xf32>
    %c0_13 = arith.constant 0 : index
    %c0_14 = arith.constant 0 : index
    %7 = vector.load %arg8[%c0_13, %c0_14] : memref<1x128xf32, #tpu.memory_space<vmem>>, vector<1x128xf32>
    %c0_15 = arith.constant 0 : index
    %c0_16 = arith.constant 0 : index
    %8 = vector.load %arg0[%c0_15, %c0_16] : memref<64x4xf32, #tpu.memory_space<vmem>>, vector<64x4xf32>
    %cst = arith.constant dense<0.000000e+00> : vector<64x128xf32>
    %9 = tpu.matmul %8, %0, %cst {dimension_numbers = #tpu.dot_dimension_numbers<[1], [0], [0], [1], [0, 0, 1, 1], [], []>} : vector<64x4xf32>, vector<4x128xf32>, vector<64x128xf32> -> vector<64x128xf32>
    %10 = vector.broadcast %2 : vector<1x128xf32> to vector<64x128xf32>
    %11 = arith.addf %9, %10 : vector<64x128xf32>
    %cst_17 = arith.constant 0.000000e+00 : f32
    %12 = vector.broadcast %cst_17 : f32 to vector<8x32xf32>
    %cst_18 = arith.constant 0.000000e+00 : f32
    %13 = vector.broadcast %cst_18 : f32 to vector<8x32xf32>
    %14 = vector.extract_strided_slice %11 {offsets = [0, 0], sizes = [8, 128], strides = [1, 1]} : vector<64x128xf32> to vector<8x128xf32>
    %cst_19 = arith.constant dense<0.000000e+00> : vector<8x128xf32>
    %15 = tpu.matmul %12, %1, %cst_19 {dimension_numbers = #tpu.dot_dimension_numbers<[1], [0], [0], [1], [0, 0, 1, 1], [], []>} : vector<8x32xf32>, vector<32x128xf32>, vector<8x128xf32> -> vector<8x128xf32>
    %16 = arith.addf %14, %15 : vector<8x128xf32>
    %cst_20 = arith.constant 5.000000e-01 : f32
    %17 = vector.broadcast %cst_20 : f32 to vector<8x128xf32>
    %18 = arith.mulf %17, %16 : vector<8x128xf32>
    %19 = math.tanh %18 : vector<8x128xf32>
    %20 = vector.extract_strided_slice %19 {offsets = [0, 0], sizes = [8, 32], strides = [1, 1]} : vector<8x128xf32> to vector<8x32xf32>
    %cst_21 = arith.constant 1.000000e+00 : f32
    %21 = vector.broadcast %cst_21 : f32 to vector<8x32xf32>
    %22 = arith.addf %20, %21 : vector<8x32xf32>
    %cst_22 = arith.constant 5.000000e-01 : f32
    %23 = vector.broadcast %cst_22 : f32 to vector<8x32xf32>
    %24 = arith.mulf %23, %22 : vector<8x32xf32>
    %25 = vector.extract_strided_slice %19 {offsets = [0, 32], sizes = [8, 32], strides = [1, 1]} : vector<8x128xf32> to vector<8x32xf32>
    %cst_23 = arith.constant 1.000000e+00 : f32
    %26 = vector.broadcast %cst_23 : f32 to vector<8x32xf32>
    %27 = arith.addf %25, %26 : vector<8x32xf32>
    %cst_24 = arith.constant 5.000000e-01 : f32
    %28 = vector.broadcast %cst_24 : f32 to vector<8x32xf32>
    %29 = arith.mulf %28, %27 : vector<8x32xf32>
    %30 = vector.extract_strided_slice %19 {offsets = [0, 64], sizes = [8, 32], strides = [1, 1]} : vector<8x128xf32> to vector<8x32xf32>
    %31 = vector.extract_strided_slice %19 {offsets = [0, 96], sizes = [8, 32], strides = [1, 1]} : vector<8x128xf32> to vector<8x32xf32>
    %cst_25 = arith.constant 1.000000e+00 : f32
    %32 = vector.broadcast %cst_25 : f32 to vector<8x32xf32>
    %33 = arith.addf %31, %32 : vector<8x32xf32>
    %cst_26 = arith.constant 5.000000e-01 : f32
    %34 = vector.broadcast %cst_26 : f32 to vector<8x32xf32>
    %35 = arith.mulf %34, %33 : vector<8x32xf32>
    %36 = arith.mulf %29, %13 : vector<8x32xf32>
    %37 = arith.mulf %24, %30 : vector<8x32xf32>
    %38 = arith.addf %36, %37 : vector<8x32xf32>
    %39 = math.tanh %38 : vector<8x32xf32>
    %40 = arith.mulf %35, %39 : vector<8x32xf32>
    %41 = vector.extract_strided_slice %11 {offsets = [8, 0], sizes = [8, 128], strides = [1, 1]} : vector<64x128xf32> to vector<8x128xf32>
    %cst_27 = arith.constant dense<0.000000e+00> : vector<8x128xf32>
    %42 = tpu.matmul %40, %1, %cst_27 {dimension_numbers = #tpu.dot_dimension_numbers<[1], [0], [0], [1], [0, 0, 1, 1], [], []>} : vector<8x32xf32>, vector<32x128xf32>, vector<8x128xf32> -> vector<8x128xf32>
    %43 = arith.addf %41, %42 : vector<8x128xf32>
    %cst_28 = arith.constant 5.000000e-01 : f32
    %44 = vector.broadcast %cst_28 : f32 to vector<8x128xf32>
    %45 = arith.mulf %44, %43 : vector<8x128xf32>
    %46 = math.tanh %45 : vector<8x128xf32>
    %47 = vector.extract_strided_slice %46 {offsets = [0, 0], sizes = [8, 32], strides = [1, 1]} : vector<8x128xf32> to vector<8x32xf32>
    %cst_29 = arith.constant 1.000000e+00 : f32
    %48 = vector.broadcast %cst_29 : f32 to vector<8x32xf32>
    %49 = arith.addf %47, %48 : vector<8x32xf32>
    %cst_30 = arith.constant 5.000000e-01 : f32
    %50 = vector.broadcast %cst_30 : f32 to vector<8x32xf32>
    %51 = arith.mulf %50, %49 : vector<8x32xf32>
    %52 = vector.extract_strided_slice %46 {offsets = [0, 32], sizes = [8, 32], strides = [1, 1]} : vector<8x128xf32> to vector<8x32xf32>
    %cst_31 = arith.constant 1.000000e+00 : f32
    %53 = vector.broadcast %cst_31 : f32 to vector<8x32xf32>
    %54 = arith.addf %52, %53 : vector<8x32xf32>
    %cst_32 = arith.constant 5.000000e-01 : f32
    %55 = vector.broadcast %cst_32 : f32 to vector<8x32xf32>
    %56 = arith.mulf %55, %54 : vector<8x32xf32>
    %57 = vector.extract_strided_slice %46 {offsets = [0, 64], sizes = [8, 32], strides = [1, 1]} : vector<8x128xf32> to vector<8x32xf32>
    %58 = vector.extract_strided_slice %46 {offsets = [0, 96], sizes = [8, 32], strides = [1, 1]} : vector<8x128xf32> to vector<8x32xf32>
    %cst_33 = arith.constant 1.000000e+00 : f32
    %59 = vector.broadcast %cst_33 : f32 to vector<8x32xf32>
    %60 = arith.addf %58, %59 : vector<8x32xf32>
    %cst_34 = arith.constant 5.000000e-01 : f32
    %61 = vector.broadcast %cst_34 : f32 to vector<8x32xf32>
    %62 = arith.mulf %61, %60 : vector<8x32xf32>
    %63 = arith.mulf %56, %38 : vector<8x32xf32>
    %64 = arith.mulf %51, %57 : vector<8x32xf32>
    %65 = arith.addf %63, %64 : vector<8x32xf32>
    %66 = math.tanh %65 : vector<8x32xf32>
    %67 = arith.mulf %62, %66 : vector<8x32xf32>
    %68 = vector.extract_strided_slice %11 {offsets = [16, 0], sizes = [8, 128], strides = [1, 1]} : vector<64x128xf32> to vector<8x128xf32>
    %cst_35 = arith.constant dense<0.000000e+00> : vector<8x128xf32>
    %69 = tpu.matmul %67, %1, %cst_35 {dimension_numbers = #tpu.dot_dimension_numbers<[1], [0], [0], [1], [0, 0, 1, 1], [], []>} : vector<8x32xf32>, vector<32x128xf32>, vector<8x128xf32> -> vector<8x128xf32>
    %70 = arith.addf %68, %69 : vector<8x128xf32>
    %cst_36 = arith.constant 5.000000e-01 : f32
    %71 = vector.broadcast %cst_36 : f32 to vector<8x128xf32>
    %72 = arith.mulf %71, %70 : vector<8x128xf32>
    %73 = math.tanh %72 : vector<8x128xf32>
    %74 = vector.extract_strided_slice %73 {offsets = [0, 0], sizes = [8, 32], strides = [1, 1]} : vector<8x128xf32> to vector<8x32xf32>
    %cst_37 = arith.constant 1.000000e+00 : f32
    %75 = vector.broadcast %cst_37 : f32 to vector<8x32xf32>
    %76 = arith.addf %74, %75 : vector<8x32xf32>
    %cst_38 = arith.constant 5.000000e-01 : f32
    %77 = vector.broadcast %cst_38 : f32 to vector<8x32xf32>
    %78 = arith.mulf %77, %76 : vector<8x32xf32>
    %79 = vector.extract_strided_slice %73 {offsets = [0, 32], sizes = [8, 32], strides = [1, 1]} : vector<8x128xf32> to vector<8x32xf32>
    %cst_39 = arith.constant 1.000000e+00 : f32
    %80 = vector.broadcast %cst_39 : f32 to vector<8x32xf32>
    %81 = arith.addf %79, %80 : vector<8x32xf32>
    %cst_40 = arith.constant 5.000000e-01 : f32
    %82 = vector.broadcast %cst_40 : f32 to vector<8x32xf32>
    %83 = arith.mulf %82, %81 : vector<8x32xf32>
    %84 = vector.extract_strided_slice %73 {offsets = [0, 64], sizes = [8, 32], strides = [1, 1]} : vector<8x128xf32> to vector<8x32xf32>
    %85 = vector.extract_strided_slice %73 {offsets = [0, 96], sizes = [8, 32], strides = [1, 1]} : vector<8x128xf32> to vector<8x32xf32>
    %cst_41 = arith.constant 1.000000e+00 : f32
    %86 = vector.broadcast %cst_41 : f32 to vector<8x32xf32>
    %87 = arith.addf %85, %86 : vector<8x32xf32>
    %cst_42 = arith.constant 5.000000e-01 : f32
    %88 = vector.broadcast %cst_42 : f32 to vector<8x32xf32>
    %89 = arith.mulf %88, %87 : vector<8x32xf32>
    %90 = arith.mulf %83, %65 : vector<8x32xf32>
    %91 = arith.mulf %78, %84 : vector<8x32xf32>
    %92 = arith.addf %90, %91 : vector<8x32xf32>
    %93 = math.tanh %92 : vector<8x32xf32>
    %94 = arith.mulf %89, %93 : vector<8x32xf32>
    %95 = vector.extract_strided_slice %11 {offsets = [24, 0], sizes = [8, 128], strides = [1, 1]} : vector<64x128xf32> to vector<8x128xf32>
    %cst_43 = arith.constant dense<0.000000e+00> : vector<8x128xf32>
    %96 = tpu.matmul %94, %1, %cst_43 {dimension_numbers = #tpu.dot_dimension_numbers<[1], [0], [0], [1], [0, 0, 1, 1], [], []>} : vector<8x32xf32>, vector<32x128xf32>, vector<8x128xf32> -> vector<8x128xf32>
    %97 = arith.addf %95, %96 : vector<8x128xf32>
    %cst_44 = arith.constant 5.000000e-01 : f32
    %98 = vector.broadcast %cst_44 : f32 to vector<8x128xf32>
    %99 = arith.mulf %98, %97 : vector<8x128xf32>
    %100 = math.tanh %99 : vector<8x128xf32>
    %101 = vector.extract_strided_slice %100 {offsets = [0, 0], sizes = [8, 32], strides = [1, 1]} : vector<8x128xf32> to vector<8x32xf32>
    %cst_45 = arith.constant 1.000000e+00 : f32
    %102 = vector.broadcast %cst_45 : f32 to vector<8x32xf32>
    %103 = arith.addf %101, %102 : vector<8x32xf32>
    %cst_46 = arith.constant 5.000000e-01 : f32
    %104 = vector.broadcast %cst_46 : f32 to vector<8x32xf32>
    %105 = arith.mulf %104, %103 : vector<8x32xf32>
    %106 = vector.extract_strided_slice %100 {offsets = [0, 32], sizes = [8, 32], strides = [1, 1]} : vector<8x128xf32> to vector<8x32xf32>
    %cst_47 = arith.constant 1.000000e+00 : f32
    %107 = vector.broadcast %cst_47 : f32 to vector<8x32xf32>
    %108 = arith.addf %106, %107 : vector<8x32xf32>
    %cst_48 = arith.constant 5.000000e-01 : f32
    %109 = vector.broadcast %cst_48 : f32 to vector<8x32xf32>
    %110 = arith.mulf %109, %108 : vector<8x32xf32>
    %111 = vector.extract_strided_slice %100 {offsets = [0, 64], sizes = [8, 32], strides = [1, 1]} : vector<8x128xf32> to vector<8x32xf32>
    %112 = vector.extract_strided_slice %100 {offsets = [0, 96], sizes = [8, 32], strides = [1, 1]} : vector<8x128xf32> to vector<8x32xf32>
    %cst_49 = arith.constant 1.000000e+00 : f32
    %113 = vector.broadcast %cst_49 : f32 to vector<8x32xf32>
    %114 = arith.addf %112, %113 : vector<8x32xf32>
    %cst_50 = arith.constant 5.000000e-01 : f32
    %115 = vector.broadcast %cst_50 : f32 to vector<8x32xf32>
    %116 = arith.mulf %115, %114 : vector<8x32xf32>
    %117 = arith.mulf %110, %92 : vector<8x32xf32>
    %118 = arith.mulf %105, %111 : vector<8x32xf32>
    %119 = arith.addf %117, %118 : vector<8x32xf32>
    %120 = math.tanh %119 : vector<8x32xf32>
    %121 = arith.mulf %116, %120 : vector<8x32xf32>
    %122 = vector.extract_strided_slice %11 {offsets = [32, 0], sizes = [8, 128], strides = [1, 1]} : vector<64x128xf32> to vector<8x128xf32>
    %cst_51 = arith.constant dense<0.000000e+00> : vector<8x128xf32>
    %123 = tpu.matmul %121, %1, %cst_51 {dimension_numbers = #tpu.dot_dimension_numbers<[1], [0], [0], [1], [0, 0, 1, 1], [], []>} : vector<8x32xf32>, vector<32x128xf32>, vector<8x128xf32> -> vector<8x128xf32>
    %124 = arith.addf %122, %123 : vector<8x128xf32>
    %cst_52 = arith.constant 5.000000e-01 : f32
    %125 = vector.broadcast %cst_52 : f32 to vector<8x128xf32>
    %126 = arith.mulf %125, %124 : vector<8x128xf32>
    %127 = math.tanh %126 : vector<8x128xf32>
    %128 = vector.extract_strided_slice %127 {offsets = [0, 0], sizes = [8, 32], strides = [1, 1]} : vector<8x128xf32> to vector<8x32xf32>
    %cst_53 = arith.constant 1.000000e+00 : f32
    %129 = vector.broadcast %cst_53 : f32 to vector<8x32xf32>
    %130 = arith.addf %128, %129 : vector<8x32xf32>
    %cst_54 = arith.constant 5.000000e-01 : f32
    %131 = vector.broadcast %cst_54 : f32 to vector<8x32xf32>
    %132 = arith.mulf %131, %130 : vector<8x32xf32>
    %133 = vector.extract_strided_slice %127 {offsets = [0, 32], sizes = [8, 32], strides = [1, 1]} : vector<8x128xf32> to vector<8x32xf32>
    %cst_55 = arith.constant 1.000000e+00 : f32
    %134 = vector.broadcast %cst_55 : f32 to vector<8x32xf32>
    %135 = arith.addf %133, %134 : vector<8x32xf32>
    %cst_56 = arith.constant 5.000000e-01 : f32
    %136 = vector.broadcast %cst_56 : f32 to vector<8x32xf32>
    %137 = arith.mulf %136, %135 : vector<8x32xf32>
    %138 = vector.extract_strided_slice %127 {offsets = [0, 64], sizes = [8, 32], strides = [1, 1]} : vector<8x128xf32> to vector<8x32xf32>
    %139 = vector.extract_strided_slice %127 {offsets = [0, 96], sizes = [8, 32], strides = [1, 1]} : vector<8x128xf32> to vector<8x32xf32>
    %cst_57 = arith.constant 1.000000e+00 : f32
    %140 = vector.broadcast %cst_57 : f32 to vector<8x32xf32>
    %141 = arith.addf %139, %140 : vector<8x32xf32>
    %cst_58 = arith.constant 5.000000e-01 : f32
    %142 = vector.broadcast %cst_58 : f32 to vector<8x32xf32>
    %143 = arith.mulf %142, %141 : vector<8x32xf32>
    %144 = arith.mulf %137, %119 : vector<8x32xf32>
    %145 = arith.mulf %132, %138 : vector<8x32xf32>
    %146 = arith.addf %144, %145 : vector<8x32xf32>
    %147 = math.tanh %146 : vector<8x32xf32>
    %148 = arith.mulf %143, %147 : vector<8x32xf32>
    %149 = vector.extract_strided_slice %11 {offsets = [40, 0], sizes = [8, 128], strides = [1, 1]} : vector<64x128xf32> to vector<8x128xf32>
    %cst_59 = arith.constant dense<0.000000e+00> : vector<8x128xf32>
    %150 = tpu.matmul %148, %1, %cst_59 {dimension_numbers = #tpu.dot_dimension_numbers<[1], [0], [0], [1], [0, 0, 1, 1], [], []>} : vector<8x32xf32>, vector<32x128xf32>, vector<8x128xf32> -> vector<8x128xf32>
    %151 = arith.addf %149, %150 : vector<8x128xf32>
    %cst_60 = arith.constant 5.000000e-01 : f32
    %152 = vector.broadcast %cst_60 : f32 to vector<8x128xf32>
    %153 = arith.mulf %152, %151 : vector<8x128xf32>
    %154 = math.tanh %153 : vector<8x128xf32>
    %155 = vector.extract_strided_slice %154 {offsets = [0, 0], sizes = [8, 32], strides = [1, 1]} : vector<8x128xf32> to vector<8x32xf32>
    %cst_61 = arith.constant 1.000000e+00 : f32
    %156 = vector.broadcast %cst_61 : f32 to vector<8x32xf32>
    %157 = arith.addf %155, %156 : vector<8x32xf32>
    %cst_62 = arith.constant 5.000000e-01 : f32
    %158 = vector.broadcast %cst_62 : f32 to vector<8x32xf32>
    %159 = arith.mulf %158, %157 : vector<8x32xf32>
    %160 = vector.extract_strided_slice %154 {offsets = [0, 32], sizes = [8, 32], strides = [1, 1]} : vector<8x128xf32> to vector<8x32xf32>
    %cst_63 = arith.constant 1.000000e+00 : f32
    %161 = vector.broadcast %cst_63 : f32 to vector<8x32xf32>
    %162 = arith.addf %160, %161 : vector<8x32xf32>
    %cst_64 = arith.constant 5.000000e-01 : f32
    %163 = vector.broadcast %cst_64 : f32 to vector<8x32xf32>
    %164 = arith.mulf %163, %162 : vector<8x32xf32>
    %165 = vector.extract_strided_slice %154 {offsets = [0, 64], sizes = [8, 32], strides = [1, 1]} : vector<8x128xf32> to vector<8x32xf32>
    %166 = vector.extract_strided_slice %154 {offsets = [0, 96], sizes = [8, 32], strides = [1, 1]} : vector<8x128xf32> to vector<8x32xf32>
    %cst_65 = arith.constant 1.000000e+00 : f32
    %167 = vector.broadcast %cst_65 : f32 to vector<8x32xf32>
    %168 = arith.addf %166, %167 : vector<8x32xf32>
    %cst_66 = arith.constant 5.000000e-01 : f32
    %169 = vector.broadcast %cst_66 : f32 to vector<8x32xf32>
    %170 = arith.mulf %169, %168 : vector<8x32xf32>
    %171 = arith.mulf %164, %146 : vector<8x32xf32>
    %172 = arith.mulf %159, %165 : vector<8x32xf32>
    %173 = arith.addf %171, %172 : vector<8x32xf32>
    %174 = math.tanh %173 : vector<8x32xf32>
    %175 = arith.mulf %170, %174 : vector<8x32xf32>
    %176 = vector.extract_strided_slice %11 {offsets = [48, 0], sizes = [8, 128], strides = [1, 1]} : vector<64x128xf32> to vector<8x128xf32>
    %cst_67 = arith.constant dense<0.000000e+00> : vector<8x128xf32>
    %177 = tpu.matmul %175, %1, %cst_67 {dimension_numbers = #tpu.dot_dimension_numbers<[1], [0], [0], [1], [0, 0, 1, 1], [], []>} : vector<8x32xf32>, vector<32x128xf32>, vector<8x128xf32> -> vector<8x128xf32>
    %178 = arith.addf %176, %177 : vector<8x128xf32>
    %cst_68 = arith.constant 5.000000e-01 : f32
    %179 = vector.broadcast %cst_68 : f32 to vector<8x128xf32>
    %180 = arith.mulf %179, %178 : vector<8x128xf32>
    %181 = math.tanh %180 : vector<8x128xf32>
    %182 = vector.extract_strided_slice %181 {offsets = [0, 0], sizes = [8, 32], strides = [1, 1]} : vector<8x128xf32> to vector<8x32xf32>
    %cst_69 = arith.constant 1.000000e+00 : f32
    %183 = vector.broadcast %cst_69 : f32 to vector<8x32xf32>
    %184 = arith.addf %182, %183 : vector<8x32xf32>
    %cst_70 = arith.constant 5.000000e-01 : f32
    %185 = vector.broadcast %cst_70 : f32 to vector<8x32xf32>
    %186 = arith.mulf %185, %184 : vector<8x32xf32>
    %187 = vector.extract_strided_slice %181 {offsets = [0, 32], sizes = [8, 32], strides = [1, 1]} : vector<8x128xf32> to vector<8x32xf32>
    %cst_71 = arith.constant 1.000000e+00 : f32
    %188 = vector.broadcast %cst_71 : f32 to vector<8x32xf32>
    %189 = arith.addf %187, %188 : vector<8x32xf32>
    %cst_72 = arith.constant 5.000000e-01 : f32
    %190 = vector.broadcast %cst_72 : f32 to vector<8x32xf32>
    %191 = arith.mulf %190, %189 : vector<8x32xf32>
    %192 = vector.extract_strided_slice %181 {offsets = [0, 64], sizes = [8, 32], strides = [1, 1]} : vector<8x128xf32> to vector<8x32xf32>
    %193 = vector.extract_strided_slice %181 {offsets = [0, 96], sizes = [8, 32], strides = [1, 1]} : vector<8x128xf32> to vector<8x32xf32>
    %cst_73 = arith.constant 1.000000e+00 : f32
    %194 = vector.broadcast %cst_73 : f32 to vector<8x32xf32>
    %195 = arith.addf %193, %194 : vector<8x32xf32>
    %cst_74 = arith.constant 5.000000e-01 : f32
    %196 = vector.broadcast %cst_74 : f32 to vector<8x32xf32>
    %197 = arith.mulf %196, %195 : vector<8x32xf32>
    %198 = arith.mulf %191, %173 : vector<8x32xf32>
    %199 = arith.mulf %186, %192 : vector<8x32xf32>
    %200 = arith.addf %198, %199 : vector<8x32xf32>
    %201 = math.tanh %200 : vector<8x32xf32>
    %202 = arith.mulf %197, %201 : vector<8x32xf32>
    %203 = vector.extract_strided_slice %11 {offsets = [56, 0], sizes = [8, 128], strides = [1, 1]} : vector<64x128xf32> to vector<8x128xf32>
    %cst_75 = arith.constant dense<0.000000e+00> : vector<8x128xf32>
    %204 = tpu.matmul %202, %1, %cst_75 {dimension_numbers = #tpu.dot_dimension_numbers<[1], [0], [0], [1], [0, 0, 1, 1], [], []>} : vector<8x32xf32>, vector<32x128xf32>, vector<8x128xf32> -> vector<8x128xf32>
    %205 = arith.addf %203, %204 : vector<8x128xf32>
    %cst_76 = arith.constant 5.000000e-01 : f32
    %206 = vector.broadcast %cst_76 : f32 to vector<8x128xf32>
    %207 = arith.mulf %206, %205 : vector<8x128xf32>
    %208 = math.tanh %207 : vector<8x128xf32>
    %209 = vector.extract_strided_slice %208 {offsets = [0, 0], sizes = [8, 32], strides = [1, 1]} : vector<8x128xf32> to vector<8x32xf32>
    %cst_77 = arith.constant 1.000000e+00 : f32
    %210 = vector.broadcast %cst_77 : f32 to vector<8x32xf32>
    %211 = arith.addf %209, %210 : vector<8x32xf32>
    %cst_78 = arith.constant 5.000000e-01 : f32
    %212 = vector.broadcast %cst_78 : f32 to vector<8x32xf32>
    %213 = arith.mulf %212, %211 : vector<8x32xf32>
    %214 = vector.extract_strided_slice %208 {offsets = [0, 32], sizes = [8, 32], strides = [1, 1]} : vector<8x128xf32> to vector<8x32xf32>
    %cst_79 = arith.constant 1.000000e+00 : f32
    %215 = vector.broadcast %cst_79 : f32 to vector<8x32xf32>
    %216 = arith.addf %214, %215 : vector<8x32xf32>
    %cst_80 = arith.constant 5.000000e-01 : f32
    %217 = vector.broadcast %cst_80 : f32 to vector<8x32xf32>
    %218 = arith.mulf %217, %216 : vector<8x32xf32>
    %219 = vector.extract_strided_slice %208 {offsets = [0, 64], sizes = [8, 32], strides = [1, 1]} : vector<8x128xf32> to vector<8x32xf32>
    %220 = vector.extract_strided_slice %208 {offsets = [0, 96], sizes = [8, 32], strides = [1, 1]} : vector<8x128xf32> to vector<8x32xf32>
    %cst_81 = arith.constant 1.000000e+00 : f32
    %221 = vector.broadcast %cst_81 : f32 to vector<8x32xf32>
    %222 = arith.addf %220, %221 : vector<8x32xf32>
    %cst_82 = arith.constant 5.000000e-01 : f32
    %223 = vector.broadcast %cst_82 : f32 to vector<8x32xf32>
    %224 = arith.mulf %223, %222 : vector<8x32xf32>
    %225 = arith.mulf %218, %200 : vector<8x32xf32>
    %226 = arith.mulf %213, %219 : vector<8x32xf32>
    %227 = arith.addf %225, %226 : vector<8x32xf32>
    %228 = math.tanh %227 : vector<8x32xf32>
    %229 = arith.mulf %224, %228 : vector<8x32xf32>
    %cst_83 = arith.constant dense<0.000000e+00> : vector<8x128xf32>
    %230 = tpu.matmul %229, %3, %cst_83 {dimension_numbers = #tpu.dot_dimension_numbers<[1], [0], [0], [1], [0, 0, 1, 1], [], []>} : vector<8x32xf32>, vector<32x128xf32>, vector<8x128xf32> -> vector<8x128xf32>
    %231 = vector.broadcast %5 : vector<1x128xf32> to vector<8x128xf32>
    %232 = arith.addf %230, %231 : vector<8x128xf32>
    %cst_84 = arith.constant 0.000000e+00 : f32
    %233 = vector.broadcast %cst_84 : f32 to vector<8x32xf32>
    %cst_85 = arith.constant 0.000000e+00 : f32
    %234 = vector.broadcast %cst_85 : f32 to vector<8x32xf32>
    %cst_86 = arith.constant dense<0.000000e+00> : vector<8x128xf32>
    %235 = tpu.matmul %233, %4, %cst_86 {dimension_numbers = #tpu.dot_dimension_numbers<[1], [0], [0], [1], [0, 0, 1, 1], [], []>} : vector<8x32xf32>, vector<32x128xf32>, vector<8x128xf32> -> vector<8x128xf32>
    %236 = arith.addf %232, %235 : vector<8x128xf32>
    %cst_87 = arith.constant 5.000000e-01 : f32
    %237 = vector.broadcast %cst_87 : f32 to vector<8x128xf32>
    %238 = arith.mulf %237, %236 : vector<8x128xf32>
    %239 = math.tanh %238 : vector<8x128xf32>
    %240 = vector.extract_strided_slice %239 {offsets = [0, 0], sizes = [8, 32], strides = [1, 1]} : vector<8x128xf32> to vector<8x32xf32>
    %cst_88 = arith.constant 1.000000e+00 : f32
    %241 = vector.broadcast %cst_88 : f32 to vector<8x32xf32>
    %242 = arith.addf %240, %241 : vector<8x32xf32>
    %cst_89 = arith.constant 5.000000e-01 : f32
    %243 = vector.broadcast %cst_89 : f32 to vector<8x32xf32>
    %244 = arith.mulf %243, %242 : vector<8x32xf32>
    %245 = vector.extract_strided_slice %239 {offsets = [0, 32], sizes = [8, 32], strides = [1, 1]} : vector<8x128xf32> to vector<8x32xf32>
    %cst_90 = arith.constant 1.000000e+00 : f32
    %246 = vector.broadcast %cst_90 : f32 to vector<8x32xf32>
    %247 = arith.addf %245, %246 : vector<8x32xf32>
    %cst_91 = arith.constant 5.000000e-01 : f32
    %248 = vector.broadcast %cst_91 : f32 to vector<8x32xf32>
    %249 = arith.mulf %248, %247 : vector<8x32xf32>
    %250 = vector.extract_strided_slice %239 {offsets = [0, 64], sizes = [8, 32], strides = [1, 1]} : vector<8x128xf32> to vector<8x32xf32>
    %251 = vector.extract_strided_slice %239 {offsets = [0, 96], sizes = [8, 32], strides = [1, 1]} : vector<8x128xf32> to vector<8x32xf32>
    %cst_92 = arith.constant 1.000000e+00 : f32
    %252 = vector.broadcast %cst_92 : f32 to vector<8x32xf32>
    %253 = arith.addf %251, %252 : vector<8x32xf32>
    %cst_93 = arith.constant 5.000000e-01 : f32
    %254 = vector.broadcast %cst_93 : f32 to vector<8x32xf32>
    %255 = arith.mulf %254, %253 : vector<8x32xf32>
    %256 = arith.mulf %249, %234 : vector<8x32xf32>
    %257 = arith.mulf %244, %250 : vector<8x32xf32>
    %258 = arith.addf %256, %257 : vector<8x32xf32>
    %259 = math.tanh %258 : vector<8x32xf32>
    %260 = arith.mulf %255, %259 : vector<8x32xf32>
    %cst_94 = arith.constant dense<0.000000e+00> : vector<8x128xf32>
    %261 = tpu.matmul %260, %4, %cst_94 {dimension_numbers = #tpu.dot_dimension_numbers<[1], [0], [0], [1], [0, 0, 1, 1], [], []>} : vector<8x32xf32>, vector<32x128xf32>, vector<8x128xf32> -> vector<8x128xf32>
    %262 = arith.addf %232, %261 : vector<8x128xf32>
    %cst_95 = arith.constant 5.000000e-01 : f32
    %263 = vector.broadcast %cst_95 : f32 to vector<8x128xf32>
    %264 = arith.mulf %263, %262 : vector<8x128xf32>
    %265 = math.tanh %264 : vector<8x128xf32>
    %266 = vector.extract_strided_slice %265 {offsets = [0, 0], sizes = [8, 32], strides = [1, 1]} : vector<8x128xf32> to vector<8x32xf32>
    %cst_96 = arith.constant 1.000000e+00 : f32
    %267 = vector.broadcast %cst_96 : f32 to vector<8x32xf32>
    %268 = arith.addf %266, %267 : vector<8x32xf32>
    %cst_97 = arith.constant 5.000000e-01 : f32
    %269 = vector.broadcast %cst_97 : f32 to vector<8x32xf32>
    %270 = arith.mulf %269, %268 : vector<8x32xf32>
    %271 = vector.extract_strided_slice %265 {offsets = [0, 32], sizes = [8, 32], strides = [1, 1]} : vector<8x128xf32> to vector<8x32xf32>
    %cst_98 = arith.constant 1.000000e+00 : f32
    %272 = vector.broadcast %cst_98 : f32 to vector<8x32xf32>
    %273 = arith.addf %271, %272 : vector<8x32xf32>
    %cst_99 = arith.constant 5.000000e-01 : f32
    %274 = vector.broadcast %cst_99 : f32 to vector<8x32xf32>
    %275 = arith.mulf %274, %273 : vector<8x32xf32>
    %276 = vector.extract_strided_slice %265 {offsets = [0, 64], sizes = [8, 32], strides = [1, 1]} : vector<8x128xf32> to vector<8x32xf32>
    %277 = vector.extract_strided_slice %265 {offsets = [0, 96], sizes = [8, 32], strides = [1, 1]} : vector<8x128xf32> to vector<8x32xf32>
    %cst_100 = arith.constant 1.000000e+00 : f32
    %278 = vector.broadcast %cst_100 : f32 to vector<8x32xf32>
    %279 = arith.addf %277, %278 : vector<8x32xf32>
    %cst_101 = arith.constant 5.000000e-01 : f32
    %280 = vector.broadcast %cst_101 : f32 to vector<8x32xf32>
    %281 = arith.mulf %280, %279 : vector<8x32xf32>
    %282 = arith.mulf %275, %258 : vector<8x32xf32>
    %283 = arith.mulf %270, %276 : vector<8x32xf32>
    %284 = arith.addf %282, %283 : vector<8x32xf32>
    %285 = math.tanh %284 : vector<8x32xf32>
    %286 = arith.mulf %281, %285 : vector<8x32xf32>
    %cst_102 = arith.constant dense<0.000000e+00> : vector<8x128xf32>
    %287 = tpu.matmul %286, %4, %cst_102 {dimension_numbers = #tpu.dot_dimension_numbers<[1], [0], [0], [1], [0, 0, 1, 1], [], []>} : vector<8x32xf32>, vector<32x128xf32>, vector<8x128xf32> -> vector<8x128xf32>
    %288 = arith.addf %232, %287 : vector<8x128xf32>
    %cst_103 = arith.constant 5.000000e-01 : f32
    %289 = vector.broadcast %cst_103 : f32 to vector<8x128xf32>
    %290 = arith.mulf %289, %288 : vector<8x128xf32>
    %291 = math.tanh %290 : vector<8x128xf32>
    %292 = vector.extract_strided_slice %291 {offsets = [0, 0], sizes = [8, 32], strides = [1, 1]} : vector<8x128xf32> to vector<8x32xf32>
    %cst_104 = arith.constant 1.000000e+00 : f32
    %293 = vector.broadcast %cst_104 : f32 to vector<8x32xf32>
    %294 = arith.addf %292, %293 : vector<8x32xf32>
    %cst_105 = arith.constant 5.000000e-01 : f32
    %295 = vector.broadcast %cst_105 : f32 to vector<8x32xf32>
    %296 = arith.mulf %295, %294 : vector<8x32xf32>
    %297 = vector.extract_strided_slice %291 {offsets = [0, 32], sizes = [8, 32], strides = [1, 1]} : vector<8x128xf32> to vector<8x32xf32>
    %cst_106 = arith.constant 1.000000e+00 : f32
    %298 = vector.broadcast %cst_106 : f32 to vector<8x32xf32>
    %299 = arith.addf %297, %298 : vector<8x32xf32>
    %cst_107 = arith.constant 5.000000e-01 : f32
    %300 = vector.broadcast %cst_107 : f32 to vector<8x32xf32>
    %301 = arith.mulf %300, %299 : vector<8x32xf32>
    %302 = vector.extract_strided_slice %291 {offsets = [0, 64], sizes = [8, 32], strides = [1, 1]} : vector<8x128xf32> to vector<8x32xf32>
    %303 = vector.extract_strided_slice %291 {offsets = [0, 96], sizes = [8, 32], strides = [1, 1]} : vector<8x128xf32> to vector<8x32xf32>
    %cst_108 = arith.constant 1.000000e+00 : f32
    %304 = vector.broadcast %cst_108 : f32 to vector<8x32xf32>
    %305 = arith.addf %303, %304 : vector<8x32xf32>
    %cst_109 = arith.constant 5.000000e-01 : f32
    %306 = vector.broadcast %cst_109 : f32 to vector<8x32xf32>
    %307 = arith.mulf %306, %305 : vector<8x32xf32>
    %308 = arith.mulf %301, %284 : vector<8x32xf32>
    %309 = arith.mulf %296, %302 : vector<8x32xf32>
    %310 = arith.addf %308, %309 : vector<8x32xf32>
    %311 = math.tanh %310 : vector<8x32xf32>
    %312 = arith.mulf %307, %311 : vector<8x32xf32>
    %cst_110 = arith.constant dense<0.000000e+00> : vector<8x128xf32>
    %313 = tpu.matmul %312, %4, %cst_110 {dimension_numbers = #tpu.dot_dimension_numbers<[1], [0], [0], [1], [0, 0, 1, 1], [], []>} : vector<8x32xf32>, vector<32x128xf32>, vector<8x128xf32> -> vector<8x128xf32>
    %314 = arith.addf %232, %313 : vector<8x128xf32>
    %cst_111 = arith.constant 5.000000e-01 : f32
    %315 = vector.broadcast %cst_111 : f32 to vector<8x128xf32>
    %316 = arith.mulf %315, %314 : vector<8x128xf32>
    %317 = math.tanh %316 : vector<8x128xf32>
    %318 = vector.extract_strided_slice %317 {offsets = [0, 0], sizes = [8, 32], strides = [1, 1]} : vector<8x128xf32> to vector<8x32xf32>
    %cst_112 = arith.constant 1.000000e+00 : f32
    %319 = vector.broadcast %cst_112 : f32 to vector<8x32xf32>
    %320 = arith.addf %318, %319 : vector<8x32xf32>
    %cst_113 = arith.constant 5.000000e-01 : f32
    %321 = vector.broadcast %cst_113 : f32 to vector<8x32xf32>
    %322 = arith.mulf %321, %320 : vector<8x32xf32>
    %323 = vector.extract_strided_slice %317 {offsets = [0, 32], sizes = [8, 32], strides = [1, 1]} : vector<8x128xf32> to vector<8x32xf32>
    %cst_114 = arith.constant 1.000000e+00 : f32
    %324 = vector.broadcast %cst_114 : f32 to vector<8x32xf32>
    %325 = arith.addf %323, %324 : vector<8x32xf32>
    %cst_115 = arith.constant 5.000000e-01 : f32
    %326 = vector.broadcast %cst_115 : f32 to vector<8x32xf32>
    %327 = arith.mulf %326, %325 : vector<8x32xf32>
    %328 = vector.extract_strided_slice %317 {offsets = [0, 64], sizes = [8, 32], strides = [1, 1]} : vector<8x128xf32> to vector<8x32xf32>
    %329 = vector.extract_strided_slice %317 {offsets = [0, 96], sizes = [8, 32], strides = [1, 1]} : vector<8x128xf32> to vector<8x32xf32>
    %cst_116 = arith.constant 1.000000e+00 : f32
    %330 = vector.broadcast %cst_116 : f32 to vector<8x32xf32>
    %331 = arith.addf %329, %330 : vector<8x32xf32>
    %cst_117 = arith.constant 5.000000e-01 : f32
    %332 = vector.broadcast %cst_117 : f32 to vector<8x32xf32>
    %333 = arith.mulf %332, %331 : vector<8x32xf32>
    %334 = arith.mulf %327, %310 : vector<8x32xf32>
    %335 = arith.mulf %322, %328 : vector<8x32xf32>
    %336 = arith.addf %334, %335 : vector<8x32xf32>
    %337 = math.tanh %336 : vector<8x32xf32>
    %338 = arith.mulf %333, %337 : vector<8x32xf32>
    %cst_118 = arith.constant dense<0.000000e+00> : vector<8x128xf32>
    %339 = tpu.matmul %338, %4, %cst_118 {dimension_numbers = #tpu.dot_dimension_numbers<[1], [0], [0], [1], [0, 0, 1, 1], [], []>} : vector<8x32xf32>, vector<32x128xf32>, vector<8x128xf32> -> vector<8x128xf32>
    %340 = arith.addf %232, %339 : vector<8x128xf32>
    %cst_119 = arith.constant 5.000000e-01 : f32
    %341 = vector.broadcast %cst_119 : f32 to vector<8x128xf32>
    %342 = arith.mulf %341, %340 : vector<8x128xf32>
    %343 = math.tanh %342 : vector<8x128xf32>
    %344 = vector.extract_strided_slice %343 {offsets = [0, 0], sizes = [8, 32], strides = [1, 1]} : vector<8x128xf32> to vector<8x32xf32>
    %cst_120 = arith.constant 1.000000e+00 : f32
    %345 = vector.broadcast %cst_120 : f32 to vector<8x32xf32>
    %346 = arith.addf %344, %345 : vector<8x32xf32>
    %cst_121 = arith.constant 5.000000e-01 : f32
    %347 = vector.broadcast %cst_121 : f32 to vector<8x32xf32>
    %348 = arith.mulf %347, %346 : vector<8x32xf32>
    %349 = vector.extract_strided_slice %343 {offsets = [0, 32], sizes = [8, 32], strides = [1, 1]} : vector<8x128xf32> to vector<8x32xf32>
    %cst_122 = arith.constant 1.000000e+00 : f32
    %350 = vector.broadcast %cst_122 : f32 to vector<8x32xf32>
    %351 = arith.addf %349, %350 : vector<8x32xf32>
    %cst_123 = arith.constant 5.000000e-01 : f32
    %352 = vector.broadcast %cst_123 : f32 to vector<8x32xf32>
    %353 = arith.mulf %352, %351 : vector<8x32xf32>
    %354 = vector.extract_strided_slice %343 {offsets = [0, 64], sizes = [8, 32], strides = [1, 1]} : vector<8x128xf32> to vector<8x32xf32>
    %355 = vector.extract_strided_slice %343 {offsets = [0, 96], sizes = [8, 32], strides = [1, 1]} : vector<8x128xf32> to vector<8x32xf32>
    %cst_124 = arith.constant 1.000000e+00 : f32
    %356 = vector.broadcast %cst_124 : f32 to vector<8x32xf32>
    %357 = arith.addf %355, %356 : vector<8x32xf32>
    %cst_125 = arith.constant 5.000000e-01 : f32
    %358 = vector.broadcast %cst_125 : f32 to vector<8x32xf32>
    %359 = arith.mulf %358, %357 : vector<8x32xf32>
    %360 = arith.mulf %353, %336 : vector<8x32xf32>
    %361 = arith.mulf %348, %354 : vector<8x32xf32>
    %362 = arith.addf %360, %361 : vector<8x32xf32>
    %363 = math.tanh %362 : vector<8x32xf32>
    %364 = arith.mulf %359, %363 : vector<8x32xf32>
    %cst_126 = arith.constant dense<0.000000e+00> : vector<8x128xf32>
    %365 = tpu.matmul %364, %4, %cst_126 {dimension_numbers = #tpu.dot_dimension_numbers<[1], [0], [0], [1], [0, 0, 1, 1], [], []>} : vector<8x32xf32>, vector<32x128xf32>, vector<8x128xf32> -> vector<8x128xf32>
    %366 = arith.addf %232, %365 : vector<8x128xf32>
    %cst_127 = arith.constant 5.000000e-01 : f32
    %367 = vector.broadcast %cst_127 : f32 to vector<8x128xf32>
    %368 = arith.mulf %367, %366 : vector<8x128xf32>
    %369 = math.tanh %368 : vector<8x128xf32>
    %370 = vector.extract_strided_slice %369 {offsets = [0, 0], sizes = [8, 32], strides = [1, 1]} : vector<8x128xf32> to vector<8x32xf32>
    %cst_128 = arith.constant 1.000000e+00 : f32
    %371 = vector.broadcast %cst_128 : f32 to vector<8x32xf32>
    %372 = arith.addf %370, %371 : vector<8x32xf32>
    %cst_129 = arith.constant 5.000000e-01 : f32
    %373 = vector.broadcast %cst_129 : f32 to vector<8x32xf32>
    %374 = arith.mulf %373, %372 : vector<8x32xf32>
    %375 = vector.extract_strided_slice %369 {offsets = [0, 32], sizes = [8, 32], strides = [1, 1]} : vector<8x128xf32> to vector<8x32xf32>
    %cst_130 = arith.constant 1.000000e+00 : f32
    %376 = vector.broadcast %cst_130 : f32 to vector<8x32xf32>
    %377 = arith.addf %375, %376 : vector<8x32xf32>
    %cst_131 = arith.constant 5.000000e-01 : f32
    %378 = vector.broadcast %cst_131 : f32 to vector<8x32xf32>
    %379 = arith.mulf %378, %377 : vector<8x32xf32>
    %380 = vector.extract_strided_slice %369 {offsets = [0, 64], sizes = [8, 32], strides = [1, 1]} : vector<8x128xf32> to vector<8x32xf32>
    %381 = vector.extract_strided_slice %369 {offsets = [0, 96], sizes = [8, 32], strides = [1, 1]} : vector<8x128xf32> to vector<8x32xf32>
    %cst_132 = arith.constant 1.000000e+00 : f32
    %382 = vector.broadcast %cst_132 : f32 to vector<8x32xf32>
    %383 = arith.addf %381, %382 : vector<8x32xf32>
    %cst_133 = arith.constant 5.000000e-01 : f32
    %384 = vector.broadcast %cst_133 : f32 to vector<8x32xf32>
    %385 = arith.mulf %384, %383 : vector<8x32xf32>
    %386 = arith.mulf %379, %362 : vector<8x32xf32>
    %387 = arith.mulf %374, %380 : vector<8x32xf32>
    %388 = arith.addf %386, %387 : vector<8x32xf32>
    %389 = math.tanh %388 : vector<8x32xf32>
    %390 = arith.mulf %385, %389 : vector<8x32xf32>
    %cst_134 = arith.constant dense<0.000000e+00> : vector<8x128xf32>
    %391 = tpu.matmul %390, %4, %cst_134 {dimension_numbers = #tpu.dot_dimension_numbers<[1], [0], [0], [1], [0, 0, 1, 1], [], []>} : vector<8x32xf32>, vector<32x128xf32>, vector<8x128xf32> -> vector<8x128xf32>
    %392 = arith.addf %232, %391 : vector<8x128xf32>
    %cst_135 = arith.constant 5.000000e-01 : f32
    %393 = vector.broadcast %cst_135 : f32 to vector<8x128xf32>
    %394 = arith.mulf %393, %392 : vector<8x128xf32>
    %395 = math.tanh %394 : vector<8x128xf32>
    %396 = vector.extract_strided_slice %395 {offsets = [0, 0], sizes = [8, 32], strides = [1, 1]} : vector<8x128xf32> to vector<8x32xf32>
    %cst_136 = arith.constant 1.000000e+00 : f32
    %397 = vector.broadcast %cst_136 : f32 to vector<8x32xf32>
    %398 = arith.addf %396, %397 : vector<8x32xf32>
    %cst_137 = arith.constant 5.000000e-01 : f32
    %399 = vector.broadcast %cst_137 : f32 to vector<8x32xf32>
    %400 = arith.mulf %399, %398 : vector<8x32xf32>
    %401 = vector.extract_strided_slice %395 {offsets = [0, 32], sizes = [8, 32], strides = [1, 1]} : vector<8x128xf32> to vector<8x32xf32>
    %cst_138 = arith.constant 1.000000e+00 : f32
    %402 = vector.broadcast %cst_138 : f32 to vector<8x32xf32>
    %403 = arith.addf %401, %402 : vector<8x32xf32>
    %cst_139 = arith.constant 5.000000e-01 : f32
    %404 = vector.broadcast %cst_139 : f32 to vector<8x32xf32>
    %405 = arith.mulf %404, %403 : vector<8x32xf32>
    %406 = vector.extract_strided_slice %395 {offsets = [0, 64], sizes = [8, 32], strides = [1, 1]} : vector<8x128xf32> to vector<8x32xf32>
    %407 = vector.extract_strided_slice %395 {offsets = [0, 96], sizes = [8, 32], strides = [1, 1]} : vector<8x128xf32> to vector<8x32xf32>
    %cst_140 = arith.constant 1.000000e+00 : f32
    %408 = vector.broadcast %cst_140 : f32 to vector<8x32xf32>
    %409 = arith.addf %407, %408 : vector<8x32xf32>
    %cst_141 = arith.constant 5.000000e-01 : f32
    %410 = vector.broadcast %cst_141 : f32 to vector<8x32xf32>
    %411 = arith.mulf %410, %409 : vector<8x32xf32>
    %412 = arith.mulf %405, %388 : vector<8x32xf32>
    %413 = arith.mulf %400, %406 : vector<8x32xf32>
    %414 = arith.addf %412, %413 : vector<8x32xf32>
    %415 = math.tanh %414 : vector<8x32xf32>
    %416 = arith.mulf %411, %415 : vector<8x32xf32>
    %cst_142 = arith.constant dense<0.000000e+00> : vector<8x128xf32>
    %417 = tpu.matmul %416, %4, %cst_142 {dimension_numbers = #tpu.dot_dimension_numbers<[1], [0], [0], [1], [0, 0, 1, 1], [], []>} : vector<8x32xf32>, vector<32x128xf32>, vector<8x128xf32> -> vector<8x128xf32>
    %418 = arith.addf %232, %417 : vector<8x128xf32>
    %cst_143 = arith.constant 5.000000e-01 : f32
    %419 = vector.broadcast %cst_143 : f32 to vector<8x128xf32>
    %420 = arith.mulf %419, %418 : vector<8x128xf32>
    %421 = math.tanh %420 : vector<8x128xf32>
    %422 = vector.extract_strided_slice %421 {offsets = [0, 0], sizes = [8, 32], strides = [1, 1]} : vector<8x128xf32> to vector<8x32xf32>
    %cst_144 = arith.constant 1.000000e+00 : f32
    %423 = vector.broadcast %cst_144 : f32 to vector<8x32xf32>
    %424 = arith.addf %422, %423 : vector<8x32xf32>
    %cst_145 = arith.constant 5.000000e-01 : f32
    %425 = vector.broadcast %cst_145 : f32 to vector<8x32xf32>
    %426 = arith.mulf %425, %424 : vector<8x32xf32>
    %427 = vector.extract_strided_slice %421 {offsets = [0, 32], sizes = [8, 32], strides = [1, 1]} : vector<8x128xf32> to vector<8x32xf32>
    %cst_146 = arith.constant 1.000000e+00 : f32
    %428 = vector.broadcast %cst_146 : f32 to vector<8x32xf32>
    %429 = arith.addf %427, %428 : vector<8x32xf32>
    %cst_147 = arith.constant 5.000000e-01 : f32
    %430 = vector.broadcast %cst_147 : f32 to vector<8x32xf32>
    %431 = arith.mulf %430, %429 : vector<8x32xf32>
    %432 = vector.extract_strided_slice %421 {offsets = [0, 64], sizes = [8, 32], strides = [1, 1]} : vector<8x128xf32> to vector<8x32xf32>
    %433 = vector.extract_strided_slice %421 {offsets = [0, 96], sizes = [8, 32], strides = [1, 1]} : vector<8x128xf32> to vector<8x32xf32>
    %cst_148 = arith.constant 1.000000e+00 : f32
    %434 = vector.broadcast %cst_148 : f32 to vector<8x32xf32>
    %435 = arith.addf %433, %434 : vector<8x32xf32>
    %cst_149 = arith.constant 5.000000e-01 : f32
    %436 = vector.broadcast %cst_149 : f32 to vector<8x32xf32>
    %437 = arith.mulf %436, %435 : vector<8x32xf32>
    %438 = arith.mulf %431, %414 : vector<8x32xf32>
    %439 = arith.mulf %426, %432 : vector<8x32xf32>
    %440 = arith.addf %438, %439 : vector<8x32xf32>
    %441 = math.tanh %440 : vector<8x32xf32>
    %442 = arith.mulf %437, %441 : vector<8x32xf32>
    %443 = tpu.concatenate %260, %286, %312, %338, %364, %390, %416, %442 in 0 : vector<8x32xf32>, vector<8x32xf32>, vector<8x32xf32>, vector<8x32xf32>, vector<8x32xf32>, vector<8x32xf32>, vector<8x32xf32>, vector<8x32xf32> -> vector<64x32xf32>
    %cst_150 = arith.constant dense<0.000000e+00> : vector<64x128xf32>
    %444 = tpu.matmul %443, %6, %cst_150 {dimension_numbers = #tpu.dot_dimension_numbers<[1], [0], [0], [1], [0, 0, 1, 1], [], []>} : vector<64x32xf32>, vector<32x128xf32>, vector<64x128xf32> -> vector<64x128xf32>
    %445 = vector.broadcast %7 : vector<1x128xf32> to vector<64x128xf32>
    %446 = arith.addf %444, %445 : vector<64x128xf32>
    %c0_151 = arith.constant 0 : index
    %c0_152 = arith.constant 0 : index
    %447 = vector.load %arg9[%c0_151, %c0_152] : memref<64x128xf32, #tpu.memory_space<vmem>>, vector<64x128xf32>
    tpu.vector_store %arg9[%c0_151, %c0_152], %446 {strides = array<i32>} : memref<64x128xf32, #tpu.memory_space<vmem>>, vector<64x128xf32>,
    return
  }
}

</mosaic_0001>

<llo_original>
// kernel: tpu_custom_call.1
$region0: #{tpu_custom_call.1}
  #allocation0 [shape = 'u32[]', space=smem, size = 0x4, offset = 0x4, fixed_abs, tag = 'smem constant byte address 0x4 - core index']
  #allocation1 [shape = 'u32[72,128]{1,0:T(1,128)}', space=vmem, size = 0x9000, scoped, tag = 'internal scratch']
  %s0 = inlined_call_operand.vmem [shape: f32[64,4], index: 0, kind: input, shape index: {}]
  %s1 = inlined_call_operand.vmem [shape: f32[4,128], index: 1, kind: input, shape index: {}]
  %s2 = inlined_call_operand.vmem [shape: f32[32,128], index: 2, kind: input, shape index: {}]
  %s3 = inlined_call_operand.vmem [shape: f32[1,128], index: 3, kind: input, shape index: {}]
  %s4 = inlined_call_operand.vmem [shape: f32[32,128], index: 4, kind: input, shape index: {}]
  %s5 = inlined_call_operand.hbm [shape: f32[32,128], index: 5, kind: input, shape index: {}]
  %s6 = inlined_call_operand.vmem [shape: f32[1,128], index: 6, kind: input, shape index: {}]
  %s7 = inlined_call_operand.hbm [shape: f32[32,128], index: 7, kind: input, shape index: {}]
  %s8 = inlined_call_operand.vmem [shape: f32[1,128], index: 8, kind: input, shape index: {}]
  %s9 = inlined_call_operand.hbm [shape: f32[64,128], index: 9, kind: output, shape index: {}]
  %s10 = sld [smem:[#allocation0]]
  $region54: #{tpu_custom_call.1} parent=0
    _
  %s12 = ssub.s32 1, %s10
  %s13 = scalar_select 0, %s12, %s10
  $region1: #{tpu_custom_call.1} parent=0
    #allocation2 [shape = 'u8[16384]{0}', space=vmem, size = 0x4000, scoped, tag = 'input window, operand 5, single buffered']
    #allocation3 [shape = 's32[1]{0}', space=sflag, size = 0x4, scoped, tag = 'scoped memory for tpu_custom_call.1']
    #allocation4 [shape = 's32[1]{0}', space=sflag, size = 0x4, scoped, tag = 'scoped memory for tpu_custom_call.1']
    #allocation5 [shape = 'u8[16384]{0}', space=vmem, size = 0x4000, scoped, tag = 'input window, operand 7, single buffered']
    #allocation6 [shape = 's32[1]{0}', space=sflag, size = 0x4, scoped, tag = 'scoped memory for tpu_custom_call.1']
    #allocation7 [shape = 'u8[32768]{0}', space=vmem, size = 0x8000, scoped, tag = 'output window, operand 0, single buffered']
    %14 = vsyncpa [#allocation3], 0
    %15 = vsyncpa [#allocation6], 0
    %16 = vsyncpa [#allocation4], 0
    // Predicated region
    $region2: #{tpu_custom_call.1} parent=1 // pred_check
      _
    $region3: #{tpu_custom_call.1} parent=1 // pred_check_branch
      %18 = sbr.rel (0) target = $region5
    $region4: #{tpu_custom_call.1} parent=1 // pred_region
      _
    $region5: #{tpu_custom_call.1} parent=1 // pred_fallthru
      _
    // Predicated region
    $region6: #{tpu_custom_call.1} parent=1 // pred_check
      _
    $region7: #{tpu_custom_call.1} parent=1 // pred_check_branch
      %20 = sbr.rel (0) target = $region9
    $region8: #{tpu_custom_call.1} parent=1 // pred_region
      _
    $region9: #{tpu_custom_call.1} parent=1 // pred_fallthru
      _
    // Predicated region
    $region10: #{tpu_custom_call.1} parent=1 // pred_check
      _
    $region11: #{tpu_custom_call.1} parent=1 // pred_check_branch
      %22 = sbr.rel (0) target = $region13
    $region12: #{tpu_custom_call.1} parent=1 // pred_region
      _
    $region13: #{tpu_custom_call.1} parent=1 // pred_fallthru
      _
    // Predicated region
    $region14: #{tpu_custom_call.1} parent=1 // pred_check
      _
    $region15: #{tpu_custom_call.1} parent=1 // pred_check_branch
      %24 = sbr.rel (0) target = $region17
    $region16: #{tpu_custom_call.1} parent=1 // pred_region
      _
    $region17: #{tpu_custom_call.1} parent=1 // pred_fallthru
      _
    // Predicated region
    $region18: #{tpu_custom_call.1} parent=1 // pred_check
      _
    $region19: #{tpu_custom_call.1} parent=1 // pred_check_branch
      %26 = sbr.rel (0) target = $region21
    $region20: #{tpu_custom_call.1} parent=1 // pred_region
      _
    $region21: #{tpu_custom_call.1} parent=1 // pred_fallthru
      _
    // Predicated region
    $region22: #{tpu_custom_call.1} parent=1 // pred_check
      _
    $region23: #{tpu_custom_call.1} parent=1 // pred_check_branch
      %28 = sbr.rel (0) target = $region25
    $region24: #{tpu_custom_call.1} parent=1 // pred_region
      %30 = vsyncadd [#allocation3], 0
      %s31 = sshll.u32 %s5, 4
      %s32 = int_to_ptr.hbm [resolvable:$true] %s31
      %s33 = sshll.u32 [#allocation2], 4
      %s34 = int_to_ptr.vmem [resolvable:$true] %s33
      %39 = dma.hbm_to_vmem [thread:$0]  %s32, 512, %s34, [#allocation3], 128, 128, 8
    $region25: #{tpu_custom_call.1} parent=1 // pred_fallthru
      _
    // Predicated region
    $region26: #{tpu_custom_call.1} parent=1 // pred_check
      _
    $region27: #{tpu_custom_call.1} parent=1 // pred_check_branch
      %41 = sbr.rel (0) target = $region29
    $region28: #{tpu_custom_call.1} parent=1 // pred_region
      _
    $region29: #{tpu_custom_call.1} parent=1 // pred_fallthru
      _
    // Predicated region
    $region30: #{tpu_custom_call.1} parent=1 // pred_check
      _
    $region31: #{tpu_custom_call.1} parent=1 // pred_check_branch
      %43 = sbr.rel (0) target = $region33
    $region32: #{tpu_custom_call.1} parent=1 // pred_region
      %45 = vsyncadd [#allocation6], 0
      %s46 = sshll.u32 %s7, 4
      %s47 = int_to_ptr.hbm [resolvable:$true] %s46
      %s48 = sshll.u32 [#allocation5], 4
      %s49 = int_to_ptr.vmem [resolvable:$true] %s48
      %54 = dma.hbm_to_vmem [thread:$0]  %s47, 512, %s49, [#allocation6], 128, 128, 8
    $region33: #{tpu_custom_call.1} parent=1 // pred_fallthru
      _
    // Predicated region
    $region34: #{tpu_custom_call.1} parent=1 // pred_check
      _
    $region35: #{tpu_custom_call.1} parent=1 // pred_check_branch
      %56 = sbr.rel (0) target = $region37
    $region36: #{tpu_custom_call.1} parent=1 // pred_region
      _
    $region37: #{tpu_custom_call.1} parent=1 // pred_fallthru
      _
    // Predicated region
    $region38: #{tpu_custom_call.1} parent=1 // pred_check
      _
    $region39: #{tpu_custom_call.1} parent=1 // pred_check_branch
      %58 = sbr.rel (0) target = $region41
    $region40: #{tpu_custom_call.1} parent=1 // pred_region
      %60 = dma.done [#allocation3], 512
    $region41: #{tpu_custom_call.1} parent=1 // pred_fallthru
      _
    // Predicated region
    $region42: #{tpu_custom_call.1} parent=1 // pred_check
      _
    $region43: #{tpu_custom_call.1} parent=1 // pred_check_branch
      %62 = sbr.rel (0) target = $region45
    $region44: #{tpu_custom_call.1} parent=1 // pred_region
      %64 = dma.done [#allocation6], 512
    $region45: #{tpu_custom_call.1} parent=1 // pred_fallthru
      _
    %v65 = vld [vmem:[%s1] sm:$0xf]
    %v66 = vld [vmem:[%s2] sm:$0xff]
    %v67 = vld [vmem:[%s2 + $0x8] sm:$0xff]
    %v68 = vld [vmem:[%s2 + $0x10] sm:$0xff]
    %v69 = vld [vmem:[%s2 + $0x18] sm:$0xff]
    %v70 = vld [vmem:[%s3] sm:$0x1]
    %v71 = vld [vmem:[%s4] sm:$0xff]
    %v72 = vld [vmem:[%s4 + $0x8] sm:$0xff]
    %v73 = vld [vmem:[%s4 + $0x10] sm:$0xff]
    %v74 = vld [vmem:[%s4 + $0x18] sm:$0xff]
    %v75 = vld [vmem:[#allocation2] sm:$0xff]
    %v76 = vld [vmem:[#allocation2 + $0x8] sm:$0xff]
    %v77 = vld [vmem:[#allocation2 + $0x10] sm:$0xff]
    %v78 = vld [vmem:[#allocation2 + $0x18] sm:$0xff]
    %v79 = vld [vmem:[%s6] sm:$0x1]
    %v80 = vld [vmem:[#allocation5] sm:$0xff]
    %v81 = vld [vmem:[#allocation5 + $0x8] sm:$0xff]
    %v82 = vld [vmem:[#allocation5 + $0x10] sm:$0xff]
    %v83 = vld [vmem:[#allocation5 + $0x18] sm:$0xff]
    %v84 = vld [vmem:[%s8] sm:$0x1]
    %v85 = vld [vmem:[%s0] sm:$0xff]
    %v86 = vld [vmem:[%s0 + $0x8] sm:$0xff]
    %v87 = vld [vmem:[%s0 + $0x10] sm:$0xff]
    %v88 = vld [vmem:[%s0 + $0x18] sm:$0xff]
    %v89 = vld [vmem:[%s0 + $0x20] sm:$0xff]
    %v90 = vld [vmem:[%s0 + $0x28] sm:$0xff]
    %v91 = vld [vmem:[%s0 + $0x30] sm:$0xff]
    %v92 = vld [vmem:[%s0 + $0x38] sm:$0xff]
    %v94 = vperm.slane %v70, 0
    %vm96 = vcmask 31744
    %v98 = vsel %vm96, %v85, 0
    %v101 = vsel %vm96, %v86, 0
    %v104 = vsel %vm96, %v87, 0
    %v107 = vsel %vm96, %v88, 0
    %v110 = vsel %vm96, %v89, 0
    %v113 = vsel %vm96, %v90, 0
    %v116 = vsel %vm96, %v91, 0
    %v119 = vsel %vm96, %v92, 0
    %vm121 = vcmask 1043456
    %v123 = vsel %vm121, %v65, 0
    %125 = vmatpush.msra.mxu0 0.0
    %126 = vmatpush.msra.mxu0 0.0
    %127 = vmatpush.msra.mxu0 0.0
    %128 = vmatpush.msra.mxu0 0.0
    %129 = vmatpush.msra.mxu0 0.0
    %130 = vmatpush.msra.mxu0 0.0
    %131 = vmatpush.msra.mxu0 0.0
    %132 = vmatpush.msra.mxu0 0.0
    %133 = vmatpush.msra.mxu0 0.0
    %134 = vmatpush.msra.mxu0 0.0
    %135 = vmatpush.msra.mxu0 0.0
    %136 = vmatpush.msra.mxu0 0.0
    %137 = vmatpush.msra.mxu0 0.0
    %138 = vmatpush.msra.mxu0 0.0
    %139 = vmatpush.msra.mxu0 0.0
    %140 = vmatpush.msra.mxu0 %v123
    %141 = vmatmul.f32.gmra.mxu0 %v98
    %v142 = vpop.f32.mrf.mxu0
    %v143 = vadd.f32 %v94, %v142
    %144 = vmatmul.f32.gmra.mxu0 %v101
    %v145 = vpop.f32.mrf.mxu0
    %v146 = vadd.f32 %v94, %v145
    %147 = vmatmul.f32.gmra.mxu0 %v104
    %v148 = vpop.f32.mrf.mxu0
    %v149 = vadd.f32 %v94, %v148
    %150 = vmatmul.f32.gmra.mxu0 %v107
    %v151 = vpop.f32.mrf.mxu0
    %v152 = vadd.f32 %v94, %v151
    %153 = vmatmul.f32.gmra.mxu0 %v110
    %v154 = vpop.f32.mrf.mxu0
    %v155 = vadd.f32 %v94, %v154
    %156 = vmatmul.f32.gmra.mxu0 %v113
    %v157 = vpop.f32.mrf.mxu0
    %v158 = vadd.f32 %v94, %v157
    %159 = vmatmul.f32.gmra.mxu0 %v116
    %v160 = vpop.f32.mrf.mxu0
    %v161 = vadd.f32 %v94, %v160
    %162 = vmatmul.f32.gmra.mxu0 %v119
    %v163 = vpop.f32.mrf.mxu0
    %v164 = vadd.f32 %v94, %v163
    %165 = vdwg.mxu0
    %vm166 = vcmask 261120
    %v168 = vsel %vm166, 0.0, 0
    %170 = vmatpush.msra.mxu0 0.0
    %171 = vmatpush.msra.mxu0 0.0
    %172 = vmatpush.msra.mxu0 0.0
    %173 = vmatpush.msra.mxu0 0.0
    %174 = vmatpush.msra.mxu0 0.0
    %175 = vmatpush.msra.mxu0 0.0
    %176 = vmatpush.msra.mxu0 0.0
    %177 = vmatpush.msra.mxu0 0.0
    %178 = vmatpush.msra.mxu0 0.0
    %179 = vmatpush.msra.mxu0 0.0
    %180 = vmatpush.msra.mxu0 0.0
    %181 = vmatpush.msra.mxu0 0.0
    %182 = vmatpush.msra.mxu0 %v69
    %183 = vmatpush.msra.mxu0 %v68
    %184 = vmatpush.msra.mxu0 %v67
    %185 = vmatpush.msra.mxu0 %v66
    %186 = vmatmul.f32.gmra.mxu0 %v168
    %v187 = vpop.f32.mrf.mxu0
    %v188 = vadd.f32 0.0, %v187
    %189 = vdwg.mxu0
    %v190 = vadd.f32 %v143, %v188
    %v191 = vmul.f32 %v190, 0.5
    %v192 = vtanh.pop %v191
    %v193 = vadd.f32 %v192, 1.0
    %v194 = vmul.f32 %v193, 0.5
    %v195 = vmul.f32 %v194, 0.0
    %197 = vrot.lane.b32.xlu0 %v192, 64
    %v198 = vpop.permute.xlu0 %197
    %v200 = vmul.f32 %v194, %v198
    %202 = vrot.lane.b32.xlu0 %v200, 32
    %v203 = vpop.permute.xlu0 %202
    %v205 = vadd.f32 %v195, %v203
    %v206 = vtanh.pop %v205
    %208 = vrot.lane.b32.xlu0 %v206, 64
    %v209 = vpop.permute.xlu0 %208
    %v211 = vmul.f32 %v194, %v209
    %213 = vrot.lane.b32.xlu0 %v211, 32
    %v214 = vpop.permute.xlu0 %213
    %v215 = vsel %vm166, %v214, 0
    %217 = vmatpush.msra.mxu0 0.0
    %218 = vmatpush.msra.mxu0 0.0
    %219 = vmatpush.msra.mxu0 0.0
    %220 = vmatpush.msra.mxu0 0.0
    %221 = vmatpush.msra.mxu0 0.0
    %222 = vmatpush.msra.mxu0 0.0
    %223 = vmatpush.msra.mxu0 0.0
    %224 = vmatpush.msra.mxu0 0.0
    %225 = vmatpush.msra.mxu0 0.0
    %226 = vmatpush.msra.mxu0 0.0
    %227 = vmatpush.msra.mxu0 0.0
    %228 = vmatpush.msra.mxu0 0.0
    %229 = vmatpush.msra.mxu0 %v69
    %230 = vmatpush.msra.mxu0 %v68
    %231 = vmatpush.msra.mxu0 %v67
    %232 = vmatpush.msra.mxu0 %v66
    %233 = vmatmul.f32.gmra.mxu0 %v215
    %v234 = vpop.f32.mrf.mxu0
    %v235 = vadd.f32 0.0, %v234
    %236 = vdwg.mxu0
    %v237 = vadd.f32 %v146, %v235
    %v238 = vmul.f32 %v237, 0.5
    %v239 = vtanh.pop %v238
    %v240 = vadd.f32 %v239, 1.0
    %v241 = vmul.f32 %v240, 0.5
    %v242 = vmul.f32 %v241, %v205
    %244 = vrot.lane.b32.xlu0 %v239, 64
    %v245 = vpop.permute.xlu0 %244
    %v247 = vmul.f32 %v241, %v245
    %249 = vrot.lane.b32.xlu0 %v247, 32
    %v250 = vpop.permute.xlu0 %249
    %v252 = vadd.f32 %v242, %v250
    %v253 = vtanh.pop %v252
    %255 = vrot.lane.b32.xlu0 %v253, 64
    %v256 = vpop.permute.xlu0 %255
    %v258 = vmul.f32 %v241, %v256
    %260 = vrot.lane.b32.xlu0 %v258, 32
    %v261 = vpop.permute.xlu0 %260
    %v262 = vsel %vm166, %v261, 0
    %264 = vmatpush.msra.mxu0 0.0
    %265 = vmatpush.msra.mxu0 0.0
    %266 = vmatpush.msra.mxu0 0.0
    %267 = vmatpush.msra.mxu0 0.0
    %268 = vmatpush.msra.mxu0 0.0
    %269 = vmatpush.msra.mxu0 0.0
    %270 = vmatpush.msra.mxu0 0.0
    %271 = vmatpush.msra.mxu0 0.0
    %272 = vmatpush.msra.mxu0 0.0
    %273 = vmatpush.msra.mxu0 0.0
    %274 = vmatpush.msra.mxu0 0.0
    %275 = vmatpush.msra.mxu0 0.0
    %276 = vmatpush.msra.mxu0 %v69
    %277 = vmatpush.msra.mxu0 %v68
    %278 = vmatpush.msra.mxu0 %v67
    %279 = vmatpush.msra.mxu0 %v66
    %280 = vmatmul.f32.gmra.mxu0 %v262
    %v281 = vpop.f32.mrf.mxu0
    %v282 = vadd.f32 0.0, %v281
    %283 = vdwg.mxu0
    %v284 = vadd.f32 %v149, %v282
    %v285 = vmul.f32 %v284, 0.5
    %v286 = vtanh.pop %v285
    %v287 = vadd.f32 %v286, 1.0
    %v288 = vmul.f32 %v287, 0.5
    %v289 = vmul.f32 %v288, %v252
    %291 = vrot.lane.b32.xlu0 %v286, 64
    %v292 = vpop.permute.xlu0 %291
    %v294 = vmul.f32 %v288, %v292
    %296 = vrot.lane.b32.xlu0 %v294, 32
    %v297 = vpop.permute.xlu0 %296
    %v299 = vadd.f32 %v289, %v297
    %v300 = vtanh.pop %v299
    %302 = vrot.lane.b32.xlu0 %v300, 64
    %v303 = vpop.permute.xlu0 %302
    %v305 = vmul.f32 %v288, %v303
    %307 = vrot.lane.b32.xlu0 %v305, 32
    %v308 = vpop.permute.xlu0 %307
    %v309 = vsel %vm166, %v308, 0
    %311 = vmatpush.msra.mxu0 0.0
    %312 = vmatpush.msra.mxu0 0.0
    %313 = vmatpush.msra.mxu0 0.0
    %314 = vmatpush.msra.mxu0 0.0
    %315 = vmatpush.msra.mxu0 0.0
    %316 = vmatpush.msra.mxu0 0.0
    %317 = vmatpush.msra.mxu0 0.0
    %318 = vmatpush.msra.mxu0 0.0
    %319 = vmatpush.msra.mxu0 0.0
    %320 = vmatpush.msra.mxu0 0.0
    %321 = vmatpush.msra.mxu0 0.0
    %322 = vmatpush.msra.mxu0 0.0
    %323 = vmatpush.msra.mxu0 %v69
    %324 = vmatpush.msra.mxu0 %v68
    %325 = vmatpush.msra.mxu0 %v67
    %326 = vmatpush.msra.mxu0 %v66
    %327 = vmatmul.f32.gmra.mxu0 %v309
    %v328 = vpop.f32.mrf.mxu0
    %v329 = vadd.f32 0.0, %v328
    %330 = vdwg.mxu0
    %v331 = vadd.f32 %v152, %v329
    %v332 = vmul.f32 %v331, 0.5
    %v333 = vtanh.pop %v332
    %v334 = vadd.f32 %v333, 1.0
    %v335 = vmul.f32 %v334, 0.5
    %v336 = vmul.f32 %v335, %v299
    %338 = vrot.lane.b32.xlu0 %v333, 64
    %v339 = vpop.permute.xlu0 %338
    %v341 = vmul.f32 %v335, %v339
    %343 = vrot.lane.b32.xlu0 %v341, 32
    %v344 = vpop.permute.xlu0 %343
    %v346 = vadd.f32 %v336, %v344
    %v347 = vtanh.pop %v346
    %349 = vrot.lane.b32.xlu0 %v347, 64
    %v350 = vpop.permute.xlu0 %349
    %v352 = vmul.f32 %v335, %v350
    %354 = vrot.lane.b32.xlu0 %v352, 32
    %v355 = vpop.permute.xlu0 %354
    %v356 = vsel %vm166, %v355, 0
    %358 = vmatpush.msra.mxu0 0.0
    %359 = vmatpush.msra.mxu0 0.0
    %360 = vmatpush.msra.mxu0 0.0
    %361 = vmatpush.msra.mxu0 0.0
    %362 = vmatpush.msra.mxu0 0.0
    %363 = vmatpush.msra.mxu0 0.0
    %364 = vmatpush.msra.mxu0 0.0
    %365 = vmatpush.msra.mxu0 0.0
    %366 = vmatpush.msra.mxu0 0.0
    %367 = vmatpush.msra.mxu0 0.0
    %368 = vmatpush.msra.mxu0 0.0
    %369 = vmatpush.msra.mxu0 0.0
    %370 = vmatpush.msra.mxu0 %v69
    %371 = vmatpush.msra.mxu0 %v68
    %372 = vmatpush.msra.mxu0 %v67
    %373 = vmatpush.msra.mxu0 %v66
    %374 = vmatmul.f32.gmra.mxu0 %v356
    %v375 = vpop.f32.mrf.mxu0
    %v376 = vadd.f32 0.0, %v375
    %377 = vdwg.mxu0
    %v378 = vadd.f32 %v155, %v376
    %v379 = vmul.f32 %v378, 0.5
    %v380 = vtanh.pop %v379
    %v381 = vadd.f32 %v380, 1.0
    %v382 = vmul.f32 %v381, 0.5
    %v383 = vmul.f32 %v382, %v346
    %385 = vrot.lane.b32.xlu0 %v380, 64
    %v386 = vpop.permute.xlu0 %385
    %v388 = vmul.f32 %v382, %v386
    %390 = vrot.lane.b32.xlu0 %v388, 32
    %v391 = vpop.permute.xlu0 %390
    %v393 = vadd.f32 %v383, %v391
    %v394 = vtanh.pop %v393
    %396 = vrot.lane.b32.xlu0 %v394, 64
    %v397 = vpop.permute.xlu0 %396
    %v399 = vmul.f32 %v382, %v397
    %401 = vrot.lane.b32.xlu0 %v399, 32
    %v402 = vpop.permute.xlu0 %401
    %v403 = vsel %vm166, %v402, 0
    %405 = vmatpush.msra.mxu0 0.0
    %406 = vmatpush.msra.mxu0 0.0
    %407 = vmatpush.msra.mxu0 0.0
    %408 = vmatpush.msra.mxu0 0.0
    %409 = vmatpush.msra.mxu0 0.0
    %410 = vmatpush.msra.mxu0 0.0
    %411 = vmatpush.msra.mxu0 0.0
    %412 = vmatpush.msra.mxu0 0.0
    %413 = vmatpush.msra.mxu0 0.0
    %414 = vmatpush.msra.mxu0 0.0
    %415 = vmatpush.msra.mxu0 0.0
    %416 = vmatpush.msra.mxu0 0.0
    %417 = vmatpush.msra.mxu0 %v69
    %418 = vmatpush.msra.mxu0 %v68
    %419 = vmatpush.msra.mxu0 %v67
    %420 = vmatpush.msra.mxu0 %v66
    %421 = vmatmul.f32.gmra.mxu0 %v403
    %v422 = vpop.f32.mrf.mxu0
    %v423 = vadd.f32 0.0, %v422
    %424 = vdwg.mxu0
    %v425 = vadd.f32 %v158, %v423
    %v426 = vmul.f32 %v425, 0.5
    %v427 = vtanh.pop %v426
    %v428 = vadd.f32 %v427, 1.0
    %v429 = vmul.f32 %v428, 0.5
    %v430 = vmul.f32 %v429, %v393
    %432 = vrot.lane.b32.xlu0 %v427, 64
    %v433 = vpop.permute.xlu0 %432
    %v435 = vmul.f32 %v429, %v433
    %437 = vrot.lane.b32.xlu0 %v435, 32
    %v438 = vpop.permute.xlu0 %437
    %v440 = vadd.f32 %v430, %v438
    %v441 = vtanh.pop %v440
    %443 = vrot.lane.b32.xlu0 %v441, 64
    %v444 = vpop.permute.xlu0 %443
    %v446 = vmul.f32 %v429, %v444
    %448 = vrot.lane.b32.xlu0 %v446, 32
    %v449 = vpop.permute.xlu0 %448
    %v450 = vsel %vm166, %v449, 0
    %452 = vmatpush.msra.mxu0 0.0
    %453 = vmatpush.msra.mxu0 0.0
    %454 = vmatpush.msra.mxu0 0.0
    %455 = vmatpush.msra.mxu0 0.0
    %456 = vmatpush.msra.mxu0 0.0
    %457 = vmatpush.msra.mxu0 0.0
    %458 = vmatpush.msra.mxu0 0.0
    %459 = vmatpush.msra.mxu0 0.0
    %460 = vmatpush.msra.mxu0 0.0
    %461 = vmatpush.msra.mxu0 0.0
    %462 = vmatpush.msra.mxu0 0.0
    %463 = vmatpush.msra.mxu0 0.0
    %464 = vmatpush.msra.mxu0 %v69
    %465 = vmatpush.msra.mxu0 %v68
    %466 = vmatpush.msra.mxu0 %v67
    %467 = vmatpush.msra.mxu0 %v66
    %468 = vmatmul.f32.gmra.mxu0 %v450
    %v469 = vpop.f32.mrf.mxu0
    %v470 = vadd.f32 0.0, %v469
    %471 = vdwg.mxu0
    %v472 = vadd.f32 %v161, %v470
    %v473 = vmul.f32 %v472, 0.5
    %v474 = vtanh.pop %v473
    %v475 = vadd.f32 %v474, 1.0
    %v476 = vmul.f32 %v475, 0.5
    %v477 = vmul.f32 %v476, %v440
    %479 = vrot.lane.b32.xlu0 %v474, 64
    %v480 = vpop.permute.xlu0 %479
    %v482 = vmul.f32 %v476, %v480
    %484 = vrot.lane.b32.xlu0 %v482, 32
    %v485 = vpop.permute.xlu0 %484
    %v487 = vadd.f32 %v477, %v485
    %v488 = vtanh.pop %v487
    %490 = vrot.lane.b32.xlu0 %v488, 64
    %v491 = vpop.permute.xlu0 %490
    %v493 = vmul.f32 %v476, %v491
    %495 = vrot.lane.b32.xlu0 %v493, 32
    %v496 = vpop.permute.xlu0 %495
    %v497 = vsel %vm166, %v496, 0
    %499 = vmatpush.msra.mxu0 0.0
    %500 = vmatpush.msra.mxu0 0.0
    %501 = vmatpush.msra.mxu0 0.0
    %502 = vmatpush.msra.mxu0 0.0
    %503 = vmatpush.msra.mxu0 0.0
    %504 = vmatpush.msra.mxu0 0.0
    %505 = vmatpush.msra.mxu0 0.0
    %506 = vmatpush.msra.mxu0 0.0
    %507 = vmatpush.msra.mxu0 0.0
    %508 = vmatpush.msra.mxu0 0.0
    %509 = vmatpush.msra.mxu0 0.0
    %510 = vmatpush.msra.mxu0 0.0
    %511 = vmatpush.msra.mxu0 %v69
    %512 = vmatpush.msra.mxu0 %v68
    %513 = vmatpush.msra.mxu0 %v67
    %514 = vmatpush.msra.mxu0 %v66
    %515 = vmatmul.f32.gmra.mxu0 %v497
    %v516 = vpop.f32.mrf.mxu0
    %v517 = vadd.f32 0.0, %v516
    %518 = vdwg.mxu0
    %v519 = vadd.f32 %v164, %v517
    %v520 = vmul.f32 %v519, 0.5
    %v521 = vtanh.pop %v520
    %v522 = vadd.f32 %v521, 1.0
    %v523 = vmul.f32 %v522, 0.5
    %v524 = vmul.f32 %v523, %v487
    %526 = vrot.lane.b32.xlu0 %v521, 64
    %v527 = vpop.permute.xlu0 %526
    %v529 = vmul.f32 %v523, %v527
    %531 = vrot.lane.b32.xlu0 %v529, 32
    %v532 = vpop.permute.xlu0 %531
    %v534 = vadd.f32 %v524, %v532
    %v535 = vtanh.pop %v534
    %537 = vrot.lane.b32.xlu0 %v535, 64
    %v538 = vpop.permute.xlu0 %537
    %v540 = vmul.f32 %v523, %v538
    %v542 = vperm.slane %v79, 0
    %545 = vrot.lane.b32.xlu0 %v540, 32
    %v546 = vpop.permute.xlu0 %545
    %v547 = vsel %vm166, %v546, 0
    %549 = vmatpush.msra.mxu0 0.0
    %550 = vmatpush.msra.mxu0 0.0
    %551 = vmatpush.msra.mxu0 0.0
    %552 = vmatpush.msra.mxu0 0.0
    %553 = vmatpush.msra.mxu0 0.0
    %554 = vmatpush.msra.mxu0 0.0
    %555 = vmatpush.msra.mxu0 0.0
    %556 = vmatpush.msra.mxu0 0.0
    %557 = vmatpush.msra.mxu0 0.0
    %558 = vmatpush.msra.mxu0 0.0
    %559 = vmatpush.msra.mxu0 0.0
    %560 = vmatpush.msra.mxu0 0.0
    %561 = vmatpush.msra.mxu0 %v74
    %562 = vmatpush.msra.mxu0 %v73
    %563 = vmatpush.msra.mxu0 %v72
    %564 = vmatpush.msra.mxu0 %v71
    %565 = vmatmul.f32.gmra.mxu0 %v547
    %v566 = vpop.f32.mrf.mxu0
    %v567 = vadd.f32 %v542, %v566
    %568 = vdwg.mxu0
    %569 = vmatpush.msra.mxu0 0.0
    %570 = vmatpush.msra.mxu0 0.0
    %571 = vmatpush.msra.mxu0 0.0
    %572 = vmatpush.msra.mxu0 0.0
    %573 = vmatpush.msra.mxu0 0.0
    %574 = vmatpush.msra.mxu0 0.0
    %575 = vmatpush.msra.mxu0 0.0
    %576 = vmatpush.msra.mxu0 0.0
    %577 = vmatpush.msra.mxu0 0.0
    %578 = vmatpush.msra.mxu0 0.0
    %579 = vmatpush.msra.mxu0 0.0
    %580 = vmatpush.msra.mxu0 0.0
    %581 = vmatpush.msra.mxu0 %v78
    %582 = vmatpush.msra.mxu0 %v77
    %583 = vmatpush.msra.mxu0 %v76
    %584 = vmatpush.msra.mxu0 %v75
    %585 = vmatmul.f32.gmra.mxu0 %v168
    %v586 = vpop.f32.mrf.mxu0
    %v587 = vadd.f32 0.0, %v586
    %588 = vdwg.mxu0
    %v589 = vadd.f32 %v567, %v587
    %v590 = vmul.f32 %v589, 0.5
    %v591 = vtanh.pop %v590
    %v592 = vadd.f32 %v591, 1.0
    %v593 = vmul.f32 %v592, 0.5
    %v594 = vmul.f32 %v593, 0.0
    %596 = vrot.lane.b32.xlu0 %v591, 64
    %v597 = vpop.permute.xlu0 %596
    %v599 = vmul.f32 %v593, %v597
    %601 = vrot.lane.b32.xlu0 %v599, 32
    %v602 = vpop.permute.xlu0 %601
    %v604 = vadd.f32 %v594, %v602
    %v605 = vtanh.pop %v604
    %607 = vrot.lane.b32.xlu0 %v605, 64
    %v608 = vpop.permute.xlu0 %607
    %v610 = vmul.f32 %v593, %v608
    %612 = vrot.lane.b32.xlu0 %v610, 32
    %v613 = vpop.permute.xlu0 %612
    %v614 = vsel %vm166, %v613, 0
    %616 = vmatpush.msra.mxu0 0.0
    %617 = vmatpush.msra.mxu0 0.0
    %618 = vmatpush.msra.mxu0 0.0
    %619 = vmatpush.msra.mxu0 0.0
    %620 = vmatpush.msra.mxu0 0.0
    %621 = vmatpush.msra.mxu0 0.0
    %622 = vmatpush.msra.mxu0 0.0
    %623 = vmatpush.msra.mxu0 0.0
    %624 = vmatpush.msra.mxu0 0.0
    %625 = vmatpush.msra.mxu0 0.0
    %626 = vmatpush.msra.mxu0 0.0
    %627 = vmatpush.msra.mxu0 0.0
    %628 = vmatpush.msra.mxu0 %v78
    %629 = vmatpush.msra.mxu0 %v77
    %630 = vmatpush.msra.mxu0 %v76
    %631 = vmatpush.msra.mxu0 %v75
    %632 = vmatmul.f32.gmra.mxu0 %v614
    %v633 = vpop.f32.mrf.mxu0
    %v634 = vadd.f32 0.0, %v633
    %635 = vdwg.mxu0
    %v636 = vadd.f32 %v567, %v634
    %v637 = vmul.f32 %v636, 0.5
    %v638 = vtanh.pop %v637
    %v639 = vadd.f32 %v638, 1.0
    %v640 = vmul.f32 %v639, 0.5
    %v641 = vmul.f32 %v640, %v604
    %643 = vrot.lane.b32.xlu0 %v638, 64
    %v644 = vpop.permute.xlu0 %643
    %v646 = vmul.f32 %v640, %v644
    %648 = vrot.lane.b32.xlu0 %v646, 32
    %v649 = vpop.permute.xlu0 %648
    %v651 = vadd.f32 %v641, %v649
    %v652 = vtanh.pop %v651
    %654 = vrot.lane.b32.xlu0 %v652, 64
    %v655 = vpop.permute.xlu0 %654
    %v657 = vmul.f32 %v640, %v655
    %659 = vrot.lane.b32.xlu0 %v657, 32
    %v660 = vpop.permute.xlu0 %659
    %v661 = vsel %vm166, %v660, 0
    %663 = vmatpush.msra.mxu0 0.0
    %664 = vmatpush.msra.mxu0 0.0
    %665 = vmatpush.msra.mxu0 0.0
    %666 = vmatpush.msra.mxu0 0.0
    %667 = vmatpush.msra.mxu0 0.0
    %668 = vmatpush.msra.mxu0 0.0
    %669 = vmatpush.msra.mxu0 0.0
    %670 = vmatpush.msra.mxu0 0.0
    %671 = vmatpush.msra.mxu0 0.0
    %672 = vmatpush.msra.mxu0 0.0
    %673 = vmatpush.msra.mxu0 0.0
    %674 = vmatpush.msra.mxu0 0.0
    %675 = vmatpush.msra.mxu0 %v78
    %676 = vmatpush.msra.mxu0 %v77
    %677 = vmatpush.msra.mxu0 %v76
    %678 = vmatpush.msra.mxu0 %v75
    %679 = vmatmul.f32.gmra.mxu0 %v661
    %v680 = vpop.f32.mrf.mxu0
    %v681 = vadd.f32 0.0, %v680
    %682 = vdwg.mxu0
    %v683 = vadd.f32 %v567, %v681
    %v684 = vmul.f32 %v683, 0.5
    %v685 = vtanh.pop %v684
    %v686 = vadd.f32 %v685, 1.0
    %v687 = vmul.f32 %v686, 0.5
    %v688 = vmul.f32 %v687, %v651
    %690 = vrot.lane.b32.xlu0 %v685, 64
    %v691 = vpop.permute.xlu0 %690
    %v693 = vmul.f32 %v687, %v691
    %695 = vrot.lane.b32.xlu0 %v693, 32
    %v696 = vpop.permute.xlu0 %695
    %v698 = vadd.f32 %v688, %v696
    %v699 = vtanh.pop %v698
    %701 = vrot.lane.b32.xlu0 %v699, 64
    %v702 = vpop.permute.xlu0 %701
    %v704 = vmul.f32 %v687, %v702
    %706 = vrot.lane.b32.xlu0 %v704, 32
    %v707 = vpop.permute.xlu0 %706
    %v708 = vsel %vm166, %v707, 0
    %710 = vmatpush.msra.mxu0 0.0
    %711 = vmatpush.msra.mxu0 0.0
    %712 = vmatpush.msra.mxu0 0.0
    %713 = vmatpush.msra.mxu0 0.0
    %714 = vmatpush.msra.mxu0 0.0
    %715 = vmatpush.msra.mxu0 0.0
    %716 = vmatpush.msra.mxu0 0.0
    %717 = vmatpush.msra.mxu0 0.0
    %718 = vmatpush.msra.mxu0 0.0
    %719 = vmatpush.msra.mxu0 0.0
    %720 = vmatpush.msra.mxu0 0.0
    %721 = vmatpush.msra.mxu0 0.0
    %722 = vmatpush.msra.mxu0 %v78
    %723 = vmatpush.msra.mxu0 %v77
    %724 = vmatpush.msra.mxu0 %v76
    %725 = vmatpush.msra.mxu0 %v75
    %726 = vmatmul.f32.gmra.mxu0 %v708
    %v727 = vpop.f32.mrf.mxu0
    %v728 = vadd.f32 0.0, %v727
    %729 = vdwg.mxu0
    %v730 = vadd.f32 %v567, %v728
    %v731 = vmul.f32 %v730, 0.5
    %v732 = vtanh.pop %v731
    %v733 = vadd.f32 %v732, 1.0
    %v734 = vmul.f32 %v733, 0.5
    %v735 = vmul.f32 %v734, %v698
    %737 = vrot.lane.b32.xlu0 %v732, 64
    %v738 = vpop.permute.xlu0 %737
    %v740 = vmul.f32 %v734, %v738
    %742 = vrot.lane.b32.xlu0 %v740, 32
    %v743 = vpop.permute.xlu0 %742
    %v745 = vadd.f32 %v735, %v743
    %v746 = vtanh.pop %v745
    %748 = vrot.lane.b32.xlu0 %v746, 64
    %v749 = vpop.permute.xlu0 %748
    %v751 = vmul.f32 %v734, %v749
    %753 = vrot.lane.b32.xlu0 %v751, 32
    %v754 = vpop.permute.xlu0 %753
    %v755 = vsel %vm166, %v754, 0
    %757 = vmatpush.msra.mxu0 0.0
    %758 = vmatpush.msra.mxu0 0.0
    %759 = vmatpush.msra.mxu0 0.0
    %760 = vmatpush.msra.mxu0 0.0
    %761 = vmatpush.msra.mxu0 0.0
    %762 = vmatpush.msra.mxu0 0.0
    %763 = vmatpush.msra.mxu0 0.0
    %764 = vmatpush.msra.mxu0 0.0
    %765 = vmatpush.msra.mxu0 0.0
    %766 = vmatpush.msra.mxu0 0.0
    %767 = vmatpush.msra.mxu0 0.0
    %768 = vmatpush.msra.mxu0 0.0
    %769 = vmatpush.msra.mxu0 %v78
    %770 = vmatpush.msra.mxu0 %v77
    %771 = vmatpush.msra.mxu0 %v76
    %772 = vmatpush.msra.mxu0 %v75
    %773 = vmatmul.f32.gmra.mxu0 %v755
    %v774 = vpop.f32.mrf.mxu0
    %v775 = vadd.f32 0.0, %v774
    %776 = vdwg.mxu0
    %v777 = vadd.f32 %v567, %v775
    %v778 = vmul.f32 %v777, 0.5
    %v779 = vtanh.pop %v778
    %v780 = vadd.f32 %v779, 1.0
    %v781 = vmul.f32 %v780, 0.5
    %v782 = vmul.f32 %v781, %v745
    %784 = vrot.lane.b32.xlu0 %v779, 64
    %v785 = vpop.permute.xlu0 %784
    %v787 = vmul.f32 %v781, %v785
    %789 = vrot.lane.b32.xlu0 %v787, 32
    %v790 = vpop.permute.xlu0 %789
    %v792 = vadd.f32 %v782, %v790
    %v793 = vtanh.pop %v792
    %795 = vrot.lane.b32.xlu0 %v793, 64
    %v796 = vpop.permute.xlu0 %795
    %v798 = vmul.f32 %v781, %v796
    %800 = vrot.lane.b32.xlu0 %v798, 32
    %v801 = vpop.permute.xlu0 %800
    %v802 = vsel %vm166, %v801, 0
    %804 = vmatpush.msra.mxu0 0.0
    %805 = vmatpush.msra.mxu0 0.0
    %806 = vmatpush.msra.mxu0 0.0
    %807 = vmatpush.msra.mxu0 0.0
    %808 = vmatpush.msra.mxu0 0.0
    %809 = vmatpush.msra.mxu0 0.0
    %810 = vmatpush.msra.mxu0 0.0
    %811 = vmatpush.msra.mxu0 0.0
    %812 = vmatpush.msra.mxu0 0.0
    %813 = vmatpush.msra.mxu0 0.0
    %814 = vmatpush.msra.mxu0 0.0
    %815 = vmatpush.msra.mxu0 0.0
    %816 = vmatpush.msra.mxu0 %v78
    %817 = vmatpush.msra.mxu0 %v77
    %818 = vmatpush.msra.mxu0 %v76
    %819 = vmatpush.msra.mxu0 %v75
    %820 = vmatmul.f32.gmra.mxu0 %v802
    %v821 = vpop.f32.mrf.mxu0
    %v822 = vadd.f32 0.0, %v821
    %823 = vdwg.mxu0
    %v824 = vadd.f32 %v567, %v822
    %v825 = vmul.f32 %v824, 0.5
    %v826 = vtanh.pop %v825
    %v827 = vadd.f32 %v826, 1.0
    %v828 = vmul.f32 %v827, 0.5
    %v829 = vmul.f32 %v828, %v792
    %831 = vrot.lane.b32.xlu0 %v826, 64
    %v832 = vpop.permute.xlu0 %831
    %v834 = vmul.f32 %v828, %v832
    %836 = vrot.lane.b32.xlu0 %v834, 32
    %v837 = vpop.permute.xlu0 %836
    %v839 = vadd.f32 %v829, %v837
    %v840 = vtanh.pop %v839
    %842 = vrot.lane.b32.xlu0 %v840, 64
    %v843 = vpop.permute.xlu0 %842
    %v845 = vmul.f32 %v828, %v843
    %847 = vrot.lane.b32.xlu0 %v845, 32
    %v848 = vpop.permute.xlu0 %847
    %v849 = vsel %vm166, %v848, 0
    %851 = vmatpush.msra.mxu0 0.0
    %852 = vmatpush.msra.mxu0 0.0
    %853 = vmatpush.msra.mxu0 0.0
    %854 = vmatpush.msra.mxu0 0.0
    %855 = vmatpush.msra.mxu0 0.0
    %856 = vmatpush.msra.mxu0 0.0
    %857 = vmatpush.msra.mxu0 0.0
    %858 = vmatpush.msra.mxu0 0.0
    %859 = vmatpush.msra.mxu0 0.0
    %860 = vmatpush.msra.mxu0 0.0
    %861 = vmatpush.msra.mxu0 0.0
    %862 = vmatpush.msra.mxu0 0.0
    %863 = vmatpush.msra.mxu0 %v78
    %864 = vmatpush.msra.mxu0 %v77
    %865 = vmatpush.msra.mxu0 %v76
    %866 = vmatpush.msra.mxu0 %v75
    %867 = vmatmul.f32.gmra.mxu0 %v849
    %v868 = vpop.f32.mrf.mxu0
    %v869 = vadd.f32 0.0, %v868
    %870 = vdwg.mxu0
    %v871 = vadd.f32 %v567, %v869
    %v872 = vmul.f32 %v871, 0.5
    %v873 = vtanh.pop %v872
    %v874 = vadd.f32 %v873, 1.0
    %v875 = vmul.f32 %v874, 0.5
    %v876 = vmul.f32 %v875, %v839
    %878 = vrot.lane.b32.xlu0 %v873, 64
    %v879 = vpop.permute.xlu0 %878
    %v881 = vmul.f32 %v875, %v879
    %883 = vrot.lane.b32.xlu0 %v881, 32
    %v884 = vpop.permute.xlu0 %883
    %v886 = vadd.f32 %v876, %v884
    %v887 = vtanh.pop %v886
    %889 = vrot.lane.b32.xlu0 %v887, 64
    %v890 = vpop.permute.xlu0 %889
    %v892 = vmul.f32 %v875, %v890
    %894 = vrot.lane.b32.xlu0 %v892, 32
    %v895 = vpop.permute.xlu0 %894
    %v896 = vsel %vm166, %v895, 0
    %898 = vmatpush.msra.mxu0 0.0
    %899 = vmatpush.msra.mxu0 0.0
    %900 = vmatpush.msra.mxu0 0.0
    %901 = vmatpush.msra.mxu0 0.0
    %902 = vmatpush.msra.mxu0 0.0
    %903 = vmatpush.msra.mxu0 0.0
    %904 = vmatpush.msra.mxu0 0.0
    %905 = vmatpush.msra.mxu0 0.0
    %906 = vmatpush.msra.mxu0 0.0
    %907 = vmatpush.msra.mxu0 0.0
    %908 = vmatpush.msra.mxu0 0.0
    %909 = vmatpush.msra.mxu0 0.0
    %910 = vmatpush.msra.mxu0 %v78
    %911 = vmatpush.msra.mxu0 %v77
    %912 = vmatpush.msra.mxu0 %v76
    %913 = vmatpush.msra.mxu0 %v75
    %914 = vmatmul.f32.gmra.mxu0 %v896
    %v915 = vpop.f32.mrf.mxu0
    %v916 = vadd.f32 0.0, %v915
    %917 = vdwg.mxu0
    %v918 = vadd.f32 %v567, %v916
    %v919 = vmul.f32 %v918, 0.5
    %v920 = vtanh.pop %v919
    %v921 = vadd.f32 %v920, 1.0
    %v922 = vmul.f32 %v921, 0.5
    %v923 = vmul.f32 %v922, %v886
    %925 = vrot.lane.b32.xlu0 %v920, 64
    %v926 = vpop.permute.xlu0 %925
    %v928 = vmul.f32 %v922, %v926
    %930 = vrot.lane.b32.xlu0 %v928, 32
    %v931 = vpop.permute.xlu0 %930
    %v933 = vadd.f32 %v923, %v931
    %v934 = vtanh.pop %v933
    %936 = vrot.lane.b32.xlu0 %v934, 64
    %v937 = vpop.permute.xlu0 %936
    %v939 = vmul.f32 %v922, %v937
    %v941 = vperm.slane %v84, 0
    %944 = vrot.lane.b32.xlu0 %v939, 32
    %v945 = vpop.permute.xlu0 %944
    %v946 = vsel %vm166, %v945, 0
    %948 = vmatpush.msra.mxu0 0.0
    %949 = vmatpush.msra.mxu0 0.0
    %950 = vmatpush.msra.mxu0 0.0
    %951 = vmatpush.msra.mxu0 0.0
    %952 = vmatpush.msra.mxu0 0.0
    %953 = vmatpush.msra.mxu0 0.0
    %954 = vmatpush.msra.mxu0 0.0
    %955 = vmatpush.msra.mxu0 0.0
    %956 = vmatpush.msra.mxu0 0.0
    %957 = vmatpush.msra.mxu0 0.0
    %958 = vmatpush.msra.mxu0 0.0
    %959 = vmatpush.msra.mxu0 0.0
    %960 = vmatpush.msra.mxu0 %v83
    %961 = vmatpush.msra.mxu0 %v82
    %962 = vmatpush.msra.mxu0 %v81
    %963 = vmatpush.msra.mxu0 %v80
    %964 = vmatmul.f32.gmra.mxu0 %v614
    %v965 = vpop.f32.mrf.mxu0
    %v966 = vadd.f32 %v941, %v965
    %967 = vmatmul.f32.gmra.mxu0 %v661
    %v968 = vpop.f32.mrf.mxu0
    %v969 = vadd.f32 %v941, %v968
    %970 = vmatmul.f32.gmra.mxu0 %v708
    %v971 = vpop.f32.mrf.mxu0
    %v972 = vadd.f32 %v941, %v971
    %973 = vmatmul.f32.gmra.mxu0 %v755
    %v974 = vpop.f32.mrf.mxu0
    %v975 = vadd.f32 %v941, %v974
    %976 = vmatmul.f32.gmra.mxu0 %v802
    %v977 = vpop.f32.mrf.mxu0
    %v978 = vadd.f32 %v941, %v977
    %979 = vmatmul.f32.gmra.mxu0 %v849
    %v980 = vpop.f32.mrf.mxu0
    %v981 = vadd.f32 %v941, %v980
    %982 = vmatmul.f32.gmra.mxu0 %v896
    %v983 = vpop.f32.mrf.mxu0
    %v984 = vadd.f32 %v941, %v983
    %985 = vmatmul.f32.gmra.mxu0 %v946
    %v986 = vpop.f32.mrf.mxu0
    %v987 = vadd.f32 %v941, %v986
    %988 = vdwg.mxu0
    %989 = vst [vmem:[#allocation7] sm:$0xff] %v966
    %990 = vst [vmem:[#allocation7 + $0x8] sm:$0xff] %v969
    %991 = vst [vmem:[#allocation7 + $0x10] sm:$0xff] %v972
    %992 = vst [vmem:[#allocation7 + $0x18] sm:$0xff] %v975
    %993 = vst [vmem:[#allocation7 + $0x20] sm:$0xff] %v978
    %994 = vst [vmem:[#allocation7 + $0x28] sm:$0xff] %v981
    %995 = vst [vmem:[#allocation7 + $0x30] sm:$0xff] %v984
    %996 = vst [vmem:[#allocation7 + $0x38] sm:$0xff] %v987
    // Predicated region
    $region46: #{tpu_custom_call.1} parent=1 // pred_check
      _
    $region47: #{tpu_custom_call.1} parent=1 // pred_check_branch
      %998 = sbr.rel (0) target = $region49
    $region48: #{tpu_custom_call.1} parent=1 // pred_region
      %1000 = vsyncadd [#allocation4], 0
      %s1001 = sshll.u32 [#allocation7], 4
      %s1002 = int_to_ptr.vmem [resolvable:$true] %s1001
      %s1003 = sshll.u32 %s9, 4
      %s1004 = int_to_ptr.hbm [resolvable:$true] %s1003
      %1009 = dma.vmem_to_hbm [thread:$0]  %s1002, 1024, %s1004, [#allocation4], 128, 128, 8
    $region49: #{tpu_custom_call.1} parent=1 // pred_fallthru
      _
    // Predicated region
    $region50: #{tpu_custom_call.1} parent=1 // pred_check
      _
    $region51: #{tpu_custom_call.1} parent=1 // pred_check_branch
      %1011 = sbr.rel (0) target = $region53
    $region52: #{tpu_custom_call.1} parent=1 // pred_region
      %1013 = dma.done [#allocation4], 1024
    $region53: #{tpu_custom_call.1} parent=1 // pred_fallthru
      _
    %1014 = vsyncpa [#allocation3], 1
    %1015 = vsyncpa [#allocation6], 1
    %1016 = vsyncpa [#allocation4], 1

</llo_original>
